<compile_context>
chip_gen: v7x
topology: tpu7x:2x2x1
jax: 0.10.0
libtpu: 0.0.40
codegen_flags: <defaults>
</compile_context>

<pallas_src>
import jax
import jax.numpy as jnp
from jax.experimental import pallas as pl
from jax.experimental.pallas import tpu as pltpu

IN_FEATURES = 4096
OUT_FEATURES = 300


def _linear_kernel(x_ref, w_ref, b_ref, o_ref):
    """Grid = (K // tk,), the K reduction axis ("arbitrary").
    o_ref is the resident f32 accumulator across the whole axis."""
    k = pl.program_id(0)

    partial = jnp.dot(
        x_ref[...],
        w_ref[...].astype(jnp.float32),  # no-op for f32 weights; upcast for bf16
        preferred_element_type=jnp.float32,
    )

    @pl.when(k == 0)
    def _():
        # initialize with bias (broadcast over batch rows) + first partial
        o_ref[...] = partial + b_ref[...]

    @pl.when(k != 0)
    def _():
        o_ref[...] = o_ref[...] + partial


def linear_pallas(x, w_t, b, *, tk=2048):
    """y = x @ w_t + b.

    x:    (B, K)  float32
    w_t:  (K, N)  float32 or bfloat16  (PyTorch weight transposed, unpadded)
    b:    (1, N)  float32
    """
    B, K = x.shape
    K2, N = w_t.shape
    assert K == K2 and K % tk == 0
    assert b.shape == (1, N)

    grid = (K // tk,)  # single reduction axis; 2 steps at tk=2048

    return pl.pallas_call(
        _linear_kernel,
        out_shape=jax.ShapeDtypeStruct((B, N), jnp.float32),
        grid_spec=pltpu.PrefetchScalarGridSpec(
            num_scalar_prefetch=0,
            grid=grid,
            in_specs=[
                # x K-tile: each tile DMA'd exactly once.
                pl.BlockSpec((B, tk), lambda k: (0, k)),
                # weight: full-N rows -> large contiguous DMAs of the dominant stream.
                pl.BlockSpec((tk, N), lambda k: (k, 0)),
                # bias: constant block index -> fetched once, not re-DMA'd.
                pl.BlockSpec((1, N), lambda k: (0, 0)),
            ],
            # resident output block == f32 accumulator across K.
            out_specs=pl.BlockSpec((B, N), lambda k: (0, 0)),
        ),
        compiler_params=pltpu.CompilerParams(
            dimension_semantics=("arbitrary",),
        ),
    )(x, w_t, b)


def init_params(key):
    """Deterministic init mimicking nn.Linear default (U[-1/sqrt(K), 1/sqrt(K)]).

    Returns the unpadded transposed weight (4096, 300) f32 and bias (1, 300) f32."""
    kw, kb = jax.random.split(key)
    bound = 1.0 / jnp.sqrt(jnp.float32(IN_FEATURES))
    # PyTorch weight is (out, in) = (300, 4096); store transposed (4096, 300).
    w = jax.random.uniform(
        kw, (OUT_FEATURES, IN_FEATURES), jnp.float32, -bound, bound
    )
    b = jax.random.uniform(kb, (OUT_FEATURES,), jnp.float32, -bound, bound)
    return w.T, b.reshape(1, OUT_FEATURES)


if __name__ == "__main__":
    key = jax.random.PRNGKey(0)
    k_x, k_p = jax.random.split(key)

    batch = 8  # multiple of 8 (f32 sublane); module requires K = 4096 features
    x = jax.random.normal(k_x, (batch, IN_FEATURES), jnp.float32)
    w_t_f32, b = init_params(k_p)

    # --- config 1: f32 weight master (bit-faithful to the PyTorch module) ---
    y_f32 = jax.block_until_ready(linear_pallas(x, w_t_f32, b))
    ref_f32 = x @ w_t_f32 + b[0]
    assert y_f32.shape == (batch, OUT_FEATURES)
    assert jnp.allclose(y_f32, ref_f32, atol=2e-4, rtol=1e-4)

    # --- config 2 (perf): bf16 weight master in HBM, f32 accumulation -------
    # Halves the dominant weight stream (~2x on v5e/v6e; relieves vld on v7x).
    w_t_bf16 = w_t_f32.astype(jnp.bfloat16)
    y_bf16 = jax.block_until_ready(linear_pallas(x, w_t_bf16, b))
    ref_bf16 = x @ w_t_bf16.astype(jnp.float32) + b[0]
    assert jnp.allclose(y_bf16, ref_bf16, atol=2e-3, rtol=1e-3)

    print("KERNEL_OK")
</pallas_src>

<mosaic_0001>
module attributes {stable_mosaic.version = 11 : i64} {
  func.func @_linear_kernel(%arg0: i32, %arg1: memref<8x2048xf32, #tpu.memory_space<vmem>>, %arg2: memref<2048x300xf32, #tpu.memory_space<vmem>>, %arg3: memref<1x300xf32, #tpu.memory_space<vmem>>, %arg4: memref<8x300xf32, #tpu.memory_space<vmem>>) attributes {dimension_semantics = [#tpu.dimension_semantics<arbitrary>], iteration_bounds = array<i64: 2>, scalar_prefetch = 0 : i64, scratch_operands = 0 : i64, tpu.core_type = #tpu.core_type<tc>, window_params = [{transform_indices = @transform_0, window_bounds = array<i64: 8, 2048>}, {transform_indices = @transform_1, window_bounds = array<i64: 2048, 300>}, {pipeline_mode = #tpu.pipeline_mode<synchronous>, transform_indices = @transform_2, window_bounds = array<i64: 1, 300>}, {pipeline_mode = #tpu.pipeline_mode<synchronous>, transform_indices = @transform_3, window_bounds = array<i64: 8, 300>}]} {
    %c0 = arith.constant 0 : index
    %c0_0 = arith.constant 0 : index
    %0 = vector.load %arg1[%c0, %c0_0] : memref<8x2048xf32, #tpu.memory_space<vmem>>, vector<8x2048xf32>
    %c0_1 = arith.constant 0 : index
    %c0_2 = arith.constant 0 : index
    %1 = vector.load %arg2[%c0_1, %c0_2] : memref<2048x300xf32, #tpu.memory_space<vmem>>, vector<2048x300xf32>
    %cst = arith.constant dense<0.000000e+00> : vector<8x300xf32>
    %2 = tpu.matmul %0, %1, %cst {dimension_numbers = #tpu.dot_dimension_numbers<[1], [0], [0], [1], [0, 0, 1, 1], [], []>} : vector<8x2048xf32>, vector<2048x300xf32>, vector<8x300xf32> -> vector<8x300xf32>
    %c0_i32 = arith.constant 0 : i32
    %3 = arith.cmpi eq, %arg0, %c0_i32 : i32
    %4 = arith.extui %3 : i1 to i32
    %c0_i32_3 = arith.constant 0 : i32
    %5 = arith.cmpi ne, %4, %c0_i32_3 : i32
    scf.if %5 {
      %c0_6 = arith.constant 0 : index
      %c0_7 = arith.constant 0 : index
      %9 = vector.load %arg3[%c0_6, %c0_7] : memref<1x300xf32, #tpu.memory_space<vmem>>, vector<1x300xf32>
      %10 = vector.broadcast %9 : vector<1x300xf32> to vector<8x300xf32>
      %11 = arith.addf %2, %10 : vector<8x300xf32>
      %c0_8 = arith.constant 0 : index
      %c0_9 = arith.constant 0 : index
      %12 = vector.load %arg4[%c0_8, %c0_9] : memref<8x300xf32, #tpu.memory_space<vmem>>, vector<8x300xf32>
      tpu.vector_store %arg4[%c0_8, %c0_9], %11 {strides = array<i32>} : memref<8x300xf32, #tpu.memory_space<vmem>>, vector<8x300xf32>,
    } else {
    }
    %c0_i32_4 = arith.constant 0 : i32
    %6 = arith.cmpi ne, %arg0, %c0_i32_4 : i32
    %7 = arith.extui %6 : i1 to i32
    %c0_i32_5 = arith.constant 0 : i32
    %8 = arith.cmpi ne, %7, %c0_i32_5 : i32
    scf.if %8 {
      %c0_6 = arith.constant 0 : index
      %c0_7 = arith.constant 0 : index
      %9 = vector.load %arg4[%c0_6, %c0_7] : memref<8x300xf32, #tpu.memory_space<vmem>>, vector<8x300xf32>
      %10 = arith.addf %9, %2 : vector<8x300xf32>
      %c0_8 = arith.constant 0 : index
      %c0_9 = arith.constant 0 : index
      %11 = vector.load %arg4[%c0_8, %c0_9] : memref<8x300xf32, #tpu.memory_space<vmem>>, vector<8x300xf32>
      tpu.vector_store %arg4[%c0_8, %c0_9], %10 {strides = array<i32>} : memref<8x300xf32, #tpu.memory_space<vmem>>, vector<8x300xf32>,
    } else {
    }
    return
  }
  func.func @transform_0(%arg0: i32) -> (i32, i32) {
    %c0_i32 = arith.constant 0 : i32
    %c0_i32_0 = arith.constant 0 : i32
    return %c0_i32, %arg0 : i32, i32
  }
  func.func @transform_1(%arg0: i32) -> (i32, i32) {
    %c0_i32 = arith.constant 0 : i32
    %c0_i32_0 = arith.constant 0 : i32
    return %arg0, %c0_i32 : i32, i32
  }
  func.func @transform_2(%arg0: i32) -> (i32, i32) {
    %c0_i32 = arith.constant 0 : i32
    %c0_i32_0 = arith.constant 0 : i32
    %c0_i32_1 = arith.constant 0 : i32
    return %c0_i32, %c0_i32_0 : i32, i32
  }
  func.func @transform_3(%arg0: i32) -> (i32, i32) {
    %c0_i32 = arith.constant 0 : i32
    %c0_i32_0 = arith.constant 0 : i32
    %c0_i32_1 = arith.constant 0 : i32
    return %c0_i32, %c0_i32_0 : i32, i32
  }
}

</mosaic_0001>

<llo_original>
// kernel: tpu_custom_call.1
$region0: #{tpu_custom_call.1}
  #allocation0 [shape = 'u32[]', space=smem, size = 0x4, offset = 0x4, fixed_abs, tag = 'smem constant byte address 0x4 - core index']
  #allocation1 [shape = 'u32[144,128]{1,0:T(1,128)}', space=vmem, size = 0x12000, scoped, tag = 'internal scratch']
  %s0 = inlined_call_operand.vmem [shape: f32[8,4096], index: 0, kind: input, shape index: {}]
  %s1 = inlined_call_operand.vmem [shape: f32[4096,300], index: 1, kind: input, shape index: {}]
  %s2 = inlined_call_operand.vmem [shape: f32[1,300], index: 2, kind: input, shape index: {}]
  %s3 = inlined_call_operand.hbm [shape: f32[8,300], index: 3, kind: output, shape index: {}]
  %s4 = sld [smem:[#allocation0]]
  $region53: #{tpu_custom_call.1} parent=0
    _
  %s6 = ssub.s32 1, %s4
  %s7 = scalar_select 0, %s6, %s4
  $region1: #{tpu_custom_call.1} parent=0
    #allocation2 [shape = 'u8[12288]{0}', space=vmem, size = 0x3000, scoped, tag = 'output window, operand 0, single buffered']
    #allocation3 [shape = 's32[2]{0}', space=sflag, size = 0x8, scoped, tag = 'scoped memory for tpu_custom_call.1']
    %8 = vsyncpa [#allocation3], 0
    loop: start=0, step=1, limit=4
    $region2: #{tpu_custom_call.1} parent=1 // loop_pre_header
      _
    $region3: #{tpu_custom_call.1} parent=1 // loop_header
      %s10 = sphi 0, %s14
      %p11 = scmp.ge.s32.totalorder %s10, 4
      %s20 = sphi 0, %s22
      %s23 = sphi 0, %s20
      %s24 = sphi 0, %s23
      %s40 = sphi 0, %s24
      %s46 = sphi 0, %s48
      %s49 = sphi 0, %s46
      %s50 = sphi 0, %s49
      %s66 = sphi 0, %s50
      %s70 = sphi 0, %s70
      %s72 = sphi 0, %s70
      %s73 = sphi 0, %s72
      %s87 = sphi 0, %s73
      %s91 = sphi 0, %s91
      %s93 = sphi 0, %s91
      %s94 = sphi 0, %s93
      %s108 = sphi 0, %s94
    $region4: #{tpu_custom_call.1} parent=1 // loop_header_branch
      %13 = sbr.rel (%p11) target = $region8
    $region5: #{tpu_custom_call.1} parent=1 // loop_body
      %s15 = ssub.s32 %s10, 1
      %s16 = ssub.s32 %s10, 2
      %s17 = sadd.s32 %s10, 1
      %s18 = ssub.s32 %s10, %s17
      %p19 = scmp.eq.s32.totalorder %s18, 0
      %s21 = sadd.s32 %s20, 1
      %s22 = scalar_select %p19, %s20, %s21
      %p25 = pneg %p19
      %p26 = scmp.eq.s32.totalorder %s10, 1
      %p27 = por %p25, %p26
      %p28 = scmp.ne.s32.totalorder %s20, %s23
      %p29 = scmp.eq.s32.totalorder %s10, 0
      %p30 = por %p28, %p29
      %p31 = scmp.ne.s32.totalorder %s20, %s23
      %p32 = scmp.eq.s32.totalorder %s15, 1
      %p33 = por %p31, %p32
      %p34 = scmp.ne.s32.totalorder %s23, %s24
      %p35 = scmp.eq.s32.totalorder %s15, 0
      %p36 = por %p34, %p35
      %p37 = scmp.ne.s32.totalorder %s23, %s24
      %p38 = scmp.eq.s32.totalorder %s16, 1
      %p39 = por %p37, %p38
      %p41 = scmp.ne.s32.totalorder %s24, %s40
      %p42 = scmp.eq.s32.totalorder %s16, 0
      %p43 = por %p41, %p42
      %s44 = ssub.s32 %s10, %s17
      %p45 = scmp.eq.s32.totalorder %s44, 0
      %s47 = sadd.s32 %s46, 1
      %s48 = scalar_select %p45, %s46, %s47
      %p51 = pneg %p45
      %p52 = scmp.eq.s32.totalorder %s10, 1
      %p53 = por %p51, %p52
      %p54 = scmp.ne.s32.totalorder %s46, %s49
      %p55 = scmp.eq.s32.totalorder %s10, 0
      %p56 = por %p54, %p55
      %p57 = scmp.ne.s32.totalorder %s46, %s49
      %p58 = scmp.eq.s32.totalorder %s15, 1
      %p59 = por %p57, %p58
      %p60 = scmp.ne.s32.totalorder %s49, %s50
      %p61 = scmp.eq.s32.totalorder %s15, 0
      %p62 = por %p60, %p61
      %p63 = scmp.ne.s32.totalorder %s49, %s50
      %p64 = scmp.eq.s32.totalorder %s16, 1
      %p65 = por %p63, %p64
      %p67 = scmp.ne.s32.totalorder %s50, %s66
      %p68 = scmp.eq.s32.totalorder %s16, 0
      %p69 = por %p67, %p68
      %s71 = sadd.s32 %s70, 1
      %p74 = scmp.eq.s32.totalorder %s10, 1
      %p75 = scmp.ne.s32.totalorder %s70, %s72
      %p76 = scmp.eq.s32.totalorder %s10, 0
      %p77 = por %p75, %p76
      %p78 = scmp.ne.s32.totalorder %s70, %s72
      %p79 = scmp.eq.s32.totalorder %s15, 1
      %p80 = por %p78, %p79
      %p81 = scmp.ne.s32.totalorder %s72, %s73
      %p82 = scmp.eq.s32.totalorder %s15, 0
      %p83 = por %p81, %p82
      %p84 = scmp.ne.s32.totalorder %s72, %s73
      %p85 = scmp.eq.s32.totalorder %s16, 1
      %p86 = por %p84, %p85
      %p88 = scmp.ne.s32.totalorder %s73, %s87
      %p89 = scmp.eq.s32.totalorder %s16, 0
      %p90 = por %p88, %p89
      %s92 = sadd.s32 %s91, 1
      %p95 = scmp.eq.s32.totalorder %s10, 1
      %p96 = scmp.ne.s32.totalorder %s91, %s93
      %p97 = scmp.eq.s32.totalorder %s10, 0
      %p98 = por %p96, %p97
      %p99 = scmp.ne.s32.totalorder %s91, %s93
      %p100 = scmp.eq.s32.totalorder %s15, 1
      %p101 = por %p99, %p100
      %p102 = scmp.ne.s32.totalorder %s93, %s94
      %p103 = scmp.eq.s32.totalorder %s15, 0
      %p104 = por %p102, %p103
      %p105 = scmp.ne.s32.totalorder %s93, %s94
      %p106 = scmp.eq.s32.totalorder %s16, 1
      %p107 = por %p105, %p106
      %p109 = scmp.ne.s32.totalorder %s94, %s108
      %p110 = scmp.eq.s32.totalorder %s16, 0
      %p111 = por %p109, %p110
      %p112 = scmp.le.s32.totalorder 1, %s10
      %p113 = scmp.lt.s32.totalorder %s10, 3
      %p114 = pnand %p112, %p113
      %p115 = pneg %p114
      // Predicated region
      $region9: #{tpu_custom_call.1} parent=5 // pred_check
        _
      $region10: #{tpu_custom_call.1} parent=5 // pred_check_branch
        %117 = sbr.rel (%p114) target = $region12
      $region11: #{tpu_custom_call.1} parent=5 // pred_region
        %s118 = ssub.s32 %s10, 1
        // Predicated region
        $region13: #{tpu_custom_call.1} parent=11 // pred_check
          %p119 = pneg %p83
        $region14: #{tpu_custom_call.1} parent=11 // pred_check_branch
          %121 = sbr.rel (%p119) target = $region16
        $region15: #{tpu_custom_call.1} parent=11 // pred_region
          _
        $region16: #{tpu_custom_call.1} parent=11 // pred_fallthru
          _
      $region12: #{tpu_custom_call.1} parent=5 // pred_fallthru
        _
      %p122 = scmp.lt.s32.totalorder %s10, 2
      // Predicated region
      $region17: #{tpu_custom_call.1} parent=5 // pred_check
        %p123 = pneg %p122
      $region18: #{tpu_custom_call.1} parent=5 // pred_check_branch
        %125 = sbr.rel (%p123) target = $region20
      $region19: #{tpu_custom_call.1} parent=5 // pred_region
        // Predicated region
        $region21: #{tpu_custom_call.1} parent=19 // pred_check
          %p126 = pneg %p30
        $region22: #{tpu_custom_call.1} parent=19 // pred_check_branch
          %128 = sbr.rel (%p126) target = $region24
        $region23: #{tpu_custom_call.1} parent=19 // pred_region
          %s129 = smul.u32 16, %s10
          %p130 = scmp.lt.s32.totalorder %s129, 31
          %s131 = scalar_select %p130, %s129, 31
          %s132 = smul.addr %s131, 8
          %s133 = scalar_lea.vmem %s0, %s132
          %s134 = smul.u32 16, %s10
        $region24: #{tpu_custom_call.1} parent=19 // pred_fallthru
          _
        // Predicated region
        $region25: #{tpu_custom_call.1} parent=19 // pred_check
          %p135 = pneg %p56
        $region26: #{tpu_custom_call.1} parent=19 // pred_check_branch
          %137 = sbr.rel (%p135) target = $region28
        $region27: #{tpu_custom_call.1} parent=19 // pred_region
          %s138 = smul.u32 256, %s10
          %p139 = scmp.lt.s32.totalorder %s138, 511
          %s140 = scalar_select %p139, %s138, 511
          %s141 = smul.addr %s140, 3
          %s142 = smul.addr %s141, 8
          %s143 = scalar_lea.vmem %s1, %s142
          %s144 = smul.u32 256, %s10
        $region28: #{tpu_custom_call.1} parent=19 // pred_fallthru
          _
      $region20: #{tpu_custom_call.1} parent=5 // pred_fallthru
        _
      %p145 = scmp.le.s32.totalorder 1, %s10
      %p146 = scmp.lt.s32.totalorder %s10, 3
      %p147 = pnand %p145, %p146
      %p148 = pneg %p147
      // Predicated region
      $region29: #{tpu_custom_call.1} parent=5 // pred_check
        _
      $region30: #{tpu_custom_call.1} parent=5 // pred_check_branch
        %150 = sbr.rel (%p147) target = $region32
      $region31: #{tpu_custom_call.1} parent=5 // pred_region
        %s151 = ssub.s32 %s10, 1
        %s152 = smul.u32 16, %s15
        %p153 = scmp.lt.s32.totalorder %s152, 31
        %s154 = scalar_select %p153, %s152, 31
        %s155 = smul.addr %s154, 8
        %s156 = scalar_lea.vmem %s0, %s155
        %p157 = pneg %p36
        %p158 = pneg %p33
        %s159 = smul.u32 256, %s15
        %p160 = scmp.lt.s32.totalorder %s159, 511
        %s161 = scalar_select %p160, %s159, 511
        %s162 = smul.addr %s161, 3
        %s163 = smul.addr %s162, 8
        %s164 = scalar_lea.vmem %s1, %s163
        %p165 = pneg %p62
        %p166 = pneg %p59
        %p167 = pneg %p83
        %p168 = pneg %p80
        %p169 = pneg %p104
        %p170 = pneg %p101
        %s171 = smul.u32 16, %s15
        %p172 = scmp.lt.s32.totalorder %s171, 31
        %s173 = scalar_select %p172, %s171, 31
        %s174 = smul.addr %s173, 8
        %s175 = scalar_lea.vmem %s0, %s174
        %s176 = smul.u32 16, %s15
        %s177 = smul.u32 256, %s15
        %p178 = scmp.lt.s32.totalorder %s177, 511
        %s179 = scalar_select %p178, %s177, 511
        %s180 = smul.addr %s179, 3
        %s181 = smul.addr %s180, 8
        %s182 = scalar_lea.vmem %s1, %s181
        %s183 = smul.u32 256, %s15
        %v184 = vld [vmem:[%s175] sm:$0xff]
        %v185 = vld [vmem:[%s175 + $0x8] sm:$0xff]
        %v186 = vld [vmem:[%s175 + $0x10] sm:$0xff]
        %v187 = vld [vmem:[%s175 + $0x18] sm:$0xff]
        %v188 = vld [vmem:[%s175 + $0x20] sm:$0xff]
        %v189 = vld [vmem:[%s175 + $0x28] sm:$0xff]
        %v190 = vld [vmem:[%s175 + $0x30] sm:$0xff]
        %v191 = vld [vmem:[%s175 + $0x38] sm:$0xff]
        %v192 = vld [vmem:[%s175 + $0x40] sm:$0xff]
        %v193 = vld [vmem:[%s175 + $0x48] sm:$0xff]
        %v194 = vld [vmem:[%s175 + $0x50] sm:$0xff]
        %v195 = vld [vmem:[%s175 + $0x58] sm:$0xff]
        %v196 = vld [vmem:[%s175 + $0x60] sm:$0xff]
        %v197 = vld [vmem:[%s175 + $0x68] sm:$0xff]
        %v198 = vld [vmem:[%s175 + $0x70] sm:$0xff]
        %v199 = vld [vmem:[%s175 + $0x78] sm:$0xff]
        %v200 = vld [vmem:[%s182] sm:$0xff]
        %v201 = vld [vmem:[%s182 + $0x8] sm:$0xff]
        %v202 = vld [vmem:[%s182 + $0x10] sm:$0xff]
        %v203 = vld [vmem:[%s182 + $0x18] sm:$0xff]
        %v204 = vld [vmem:[%s182 + $0x20] sm:$0xff]
        %v205 = vld [vmem:[%s182 + $0x28] sm:$0xff]
        %v206 = vld [vmem:[%s182 + $0x30] sm:$0xff]
        %v207 = vld [vmem:[%s182 + $0x38] sm:$0xff]
        %v208 = vld [vmem:[%s182 + $0x40] sm:$0xff]
        %v209 = vld [vmem:[%s182 + $0x48] sm:$0xff]
        %v210 = vld [vmem:[%s182 + $0x50] sm:$0xff]
        %v211 = vld [vmem:[%s182 + $0x58] sm:$0xff]
        %v212 = vld [vmem:[%s182 + $0x60] sm:$0xff]
        %v213 = vld [vmem:[%s182 + $0x68] sm:$0xff]
        %v214 = vld [vmem:[%s182 + $0x70] sm:$0xff]
        %v215 = vld [vmem:[%s182 + $0x78] sm:$0xff]
        %v216 = vld [vmem:[%s182 + $0x80] sm:$0xff]
        %v217 = vld [vmem:[%s182 + $0x88] sm:$0xff]
        %v218 = vld [vmem:[%s182 + $0x90] sm:$0xff]
        %v219 = vld [vmem:[%s182 + $0x98] sm:$0xff]
        %v220 = vld [vmem:[%s182 + $0xa0] sm:$0xff]
        %v221 = vld [vmem:[%s182 + $0xa8] sm:$0xff]
        %v222 = vld [vmem:[%s182 + $0xb0] sm:$0xff]
        %v223 = vld [vmem:[%s182 + $0xb8] sm:$0xff]
        %v224 = vld [vmem:[%s182 + $0xc0] sm:$0xff]
        %v225 = vld [vmem:[%s182 + $0xc8] sm:$0xff]
        %v226 = vld [vmem:[%s182 + $0xd0] sm:$0xff]
        %v227 = vld [vmem:[%s182 + $0xd8] sm:$0xff]
        %v228 = vld [vmem:[%s182 + $0xe0] sm:$0xff]
        %v229 = vld [vmem:[%s182 + $0xe8] sm:$0xff]
        %v230 = vld [vmem:[%s182 + $0xf0] sm:$0xff]
        %v231 = vld [vmem:[%s182 + $0xf8] sm:$0xff]
        %v232 = vld [vmem:[%s182 + $0x100] sm:$0xff]
        %v233 = vld [vmem:[%s182 + $0x108] sm:$0xff]
        %v234 = vld [vmem:[%s182 + $0x110] sm:$0xff]
        %v235 = vld [vmem:[%s182 + $0x118] sm:$0xff]
        %v236 = vld [vmem:[%s182 + $0x120] sm:$0xff]
        %v237 = vld [vmem:[%s182 + $0x128] sm:$0xff]
        %v238 = vld [vmem:[%s182 + $0x130] sm:$0xff]
        %v239 = vld [vmem:[%s182 + $0x138] sm:$0xff]
        %v240 = vld [vmem:[%s182 + $0x140] sm:$0xff]
        %v241 = vld [vmem:[%s182 + $0x148] sm:$0xff]
        %v242 = vld [vmem:[%s182 + $0x150] sm:$0xff]
        %v243 = vld [vmem:[%s182 + $0x158] sm:$0xff]
        %v244 = vld [vmem:[%s182 + $0x160] sm:$0xff]
        %v245 = vld [vmem:[%s182 + $0x168] sm:$0xff]
        %v246 = vld [vmem:[%s182 + $0x170] sm:$0xff]
        %v247 = vld [vmem:[%s182 + $0x178] sm:$0xff]
        %v248 = vld [vmem:[%s182 + $0x180] sm:$0xff]
        %v249 = vld [vmem:[%s182 + $0x188] sm:$0xff]
        %v250 = vld [vmem:[%s182 + $0x190] sm:$0xff]
        %v251 = vld [vmem:[%s182 + $0x198] sm:$0xff]
        %v252 = vld [vmem:[%s182 + $0x1a0] sm:$0xff]
        %v253 = vld [vmem:[%s182 + $0x1a8] sm:$0xff]
        %v254 = vld [vmem:[%s182 + $0x1b0] sm:$0xff]
        %v255 = vld [vmem:[%s182 + $0x1b8] sm:$0xff]
        %v256 = vld [vmem:[%s182 + $0x1c0] sm:$0xff]
        %v257 = vld [vmem:[%s182 + $0x1c8] sm:$0xff]
        %v258 = vld [vmem:[%s182 + $0x1d0] sm:$0xff]
        %v259 = vld [vmem:[%s182 + $0x1d8] sm:$0xff]
        %v260 = vld [vmem:[%s182 + $0x1e0] sm:$0xff]
        %v261 = vld [vmem:[%s182 + $0x1e8] sm:$0xff]
        %v262 = vld [vmem:[%s182 + $0x1f0] sm:$0xff]
        %v263 = vld [vmem:[%s182 + $0x1f8] sm:$0xff]
        %v264 = vld [vmem:[%s182 + $0x200] sm:$0xff]
        %v265 = vld [vmem:[%s182 + $0x208] sm:$0xff]
        %v266 = vld [vmem:[%s182 + $0x210] sm:$0xff]
        %v267 = vld [vmem:[%s182 + $0x218] sm:$0xff]
        %v268 = vld [vmem:[%s182 + $0x220] sm:$0xff]
        %v269 = vld [vmem:[%s182 + $0x228] sm:$0xff]
        %v270 = vld [vmem:[%s182 + $0x230] sm:$0xff]
        %v271 = vld [vmem:[%s182 + $0x238] sm:$0xff]
        %v272 = vld [vmem:[%s182 + $0x240] sm:$0xff]
        %v273 = vld [vmem:[%s182 + $0x248] sm:$0xff]
        %v274 = vld [vmem:[%s182 + $0x250] sm:$0xff]
        %v275 = vld [vmem:[%s182 + $0x258] sm:$0xff]
        %v276 = vld [vmem:[%s182 + $0x260] sm:$0xff]
        %v277 = vld [vmem:[%s182 + $0x268] sm:$0xff]
        %v278 = vld [vmem:[%s182 + $0x270] sm:$0xff]
        %v279 = vld [vmem:[%s182 + $0x278] sm:$0xff]
        %v280 = vld [vmem:[%s182 + $0x280] sm:$0xff]
        %v281 = vld [vmem:[%s182 + $0x288] sm:$0xff]
        %v282 = vld [vmem:[%s182 + $0x290] sm:$0xff]
        %v283 = vld [vmem:[%s182 + $0x298] sm:$0xff]
        %v284 = vld [vmem:[%s182 + $0x2a0] sm:$0xff]
        %v285 = vld [vmem:[%s182 + $0x2a8] sm:$0xff]
        %v286 = vld [vmem:[%s182 + $0x2b0] sm:$0xff]
        %v287 = vld [vmem:[%s182 + $0x2b8] sm:$0xff]
        %v288 = vld [vmem:[%s182 + $0x2c0] sm:$0xff]
        %v289 = vld [vmem:[%s182 + $0x2c8] sm:$0xff]
        %v290 = vld [vmem:[%s182 + $0x2d0] sm:$0xff]
        %v291 = vld [vmem:[%s182 + $0x2d8] sm:$0xff]
        %v292 = vld [vmem:[%s182 + $0x2e0] sm:$0xff]
        %v293 = vld [vmem:[%s182 + $0x2e8] sm:$0xff]
        %v294 = vld [vmem:[%s182 + $0x2f0] sm:$0xff]
        %v295 = vld [vmem:[%s182 + $0x2f8] sm:$0xff]
        %v296 = vld [vmem:[%s182 + $0x300] sm:$0xff]
        %v297 = vld [vmem:[%s182 + $0x308] sm:$0xff]
        %v298 = vld [vmem:[%s182 + $0x310] sm:$0xff]
        %v299 = vld [vmem:[%s182 + $0x318] sm:$0xff]
        %v300 = vld [vmem:[%s182 + $0x320] sm:$0xff]
        %v301 = vld [vmem:[%s182 + $0x328] sm:$0xff]
        %v302 = vld [vmem:[%s182 + $0x330] sm:$0xff]
        %v303 = vld [vmem:[%s182 + $0x338] sm:$0xff]
        %v304 = vld [vmem:[%s182 + $0x340] sm:$0xff]
        %v305 = vld [vmem:[%s182 + $0x348] sm:$0xff]
        %v306 = vld [vmem:[%s182 + $0x350] sm:$0xff]
        %v307 = vld [vmem:[%s182 + $0x358] sm:$0xff]
        %v308 = vld [vmem:[%s182 + $0x360] sm:$0xff]
        %v309 = vld [vmem:[%s182 + $0x368] sm:$0xff]
        %v310 = vld [vmem:[%s182 + $0x370] sm:$0xff]
        %v311 = vld [vmem:[%s182 + $0x378] sm:$0xff]
        %v312 = vld [vmem:[%s182 + $0x380] sm:$0xff]
        %v313 = vld [vmem:[%s182 + $0x388] sm:$0xff]
        %v314 = vld [vmem:[%s182 + $0x390] sm:$0xff]
        %v315 = vld [vmem:[%s182 + $0x398] sm:$0xff]
        %v316 = vld [vmem:[%s182 + $0x3a0] sm:$0xff]
        %v317 = vld [vmem:[%s182 + $0x3a8] sm:$0xff]
        %v318 = vld [vmem:[%s182 + $0x3b0] sm:$0xff]
        %v319 = vld [vmem:[%s182 + $0x3b8] sm:$0xff]
        %v320 = vld [vmem:[%s182 + $0x3c0] sm:$0xff]
        %v321 = vld [vmem:[%s182 + $0x3c8] sm:$0xff]
        %v322 = vld [vmem:[%s182 + $0x3d0] sm:$0xff]
        %v323 = vld [vmem:[%s182 + $0x3d8] sm:$0xff]
        %v324 = vld [vmem:[%s182 + $0x3e0] sm:$0xff]
        %v325 = vld [vmem:[%s182 + $0x3e8] sm:$0xff]
        %v326 = vld [vmem:[%s182 + $0x3f0] sm:$0xff]
        %v327 = vld [vmem:[%s182 + $0x3f8] sm:$0xff]
        %v328 = vld [vmem:[%s182 + $0x400] sm:$0xff]
        %v329 = vld [vmem:[%s182 + $0x408] sm:$0xff]
        %v330 = vld [vmem:[%s182 + $0x410] sm:$0xff]
        %v331 = vld [vmem:[%s182 + $0x418] sm:$0xff]
        %v332 = vld [vmem:[%s182 + $0x420] sm:$0xff]
        %v333 = vld [vmem:[%s182 + $0x428] sm:$0xff]
        %v334 = vld [vmem:[%s182 + $0x430] sm:$0xff]
        %v335 = vld [vmem:[%s182 + $0x438] sm:$0xff]
        %v336 = vld [vmem:[%s182 + $0x440] sm:$0xff]
        %v337 = vld [vmem:[%s182 + $0x448] sm:$0xff]
        %v338 = vld [vmem:[%s182 + $0x450] sm:$0xff]
        %v339 = vld [vmem:[%s182 + $0x458] sm:$0xff]
        %v340 = vld [vmem:[%s182 + $0x460] sm:$0xff]
        %v341 = vld [vmem:[%s182 + $0x468] sm:$0xff]
        %v342 = vld [vmem:[%s182 + $0x470] sm:$0xff]
        %v343 = vld [vmem:[%s182 + $0x478] sm:$0xff]
        %v344 = vld [vmem:[%s182 + $0x480] sm:$0xff]
        %v345 = vld [vmem:[%s182 + $0x488] sm:$0xff]
        %v346 = vld [vmem:[%s182 + $0x490] sm:$0xff]
        %v347 = vld [vmem:[%s182 + $0x498] sm:$0xff]
        %v348 = vld [vmem:[%s182 + $0x4a0] sm:$0xff]
        %v349 = vld [vmem:[%s182 + $0x4a8] sm:$0xff]
        %v350 = vld [vmem:[%s182 + $0x4b0] sm:$0xff]
        %v351 = vld [vmem:[%s182 + $0x4b8] sm:$0xff]
        %v352 = vld [vmem:[%s182 + $0x4c0] sm:$0xff]
        %v353 = vld [vmem:[%s182 + $0x4c8] sm:$0xff]
        %v354 = vld [vmem:[%s182 + $0x4d0] sm:$0xff]
        %v355 = vld [vmem:[%s182 + $0x4d8] sm:$0xff]
        %v356 = vld [vmem:[%s182 + $0x4e0] sm:$0xff]
        %v357 = vld [vmem:[%s182 + $0x4e8] sm:$0xff]
        %v358 = vld [vmem:[%s182 + $0x4f0] sm:$0xff]
        %v359 = vld [vmem:[%s182 + $0x4f8] sm:$0xff]
        %v360 = vld [vmem:[%s182 + $0x500] sm:$0xff]
        %v361 = vld [vmem:[%s182 + $0x508] sm:$0xff]
        %v362 = vld [vmem:[%s182 + $0x510] sm:$0xff]
        %v363 = vld [vmem:[%s182 + $0x518] sm:$0xff]
        %v364 = vld [vmem:[%s182 + $0x520] sm:$0xff]
        %v365 = vld [vmem:[%s182 + $0x528] sm:$0xff]
        %v366 = vld [vmem:[%s182 + $0x530] sm:$0xff]
        %v367 = vld [vmem:[%s182 + $0x538] sm:$0xff]
        %v368 = vld [vmem:[%s182 + $0x540] sm:$0xff]
        %v369 = vld [vmem:[%s182 + $0x548] sm:$0xff]
        %v370 = vld [vmem:[%s182 + $0x550] sm:$0xff]
        %v371 = vld [vmem:[%s182 + $0x558] sm:$0xff]
        %v372 = vld [vmem:[%s182 + $0x560] sm:$0xff]
        %v373 = vld [vmem:[%s182 + $0x568] sm:$0xff]
        %v374 = vld [vmem:[%s182 + $0x570] sm:$0xff]
        %v375 = vld [vmem:[%s182 + $0x578] sm:$0xff]
        %v376 = vld [vmem:[%s182 + $0x580] sm:$0xff]
        %v377 = vld [vmem:[%s182 + $0x588] sm:$0xff]
        %v378 = vld [vmem:[%s182 + $0x590] sm:$0xff]
        %v379 = vld [vmem:[%s182 + $0x598] sm:$0xff]
        %v380 = vld [vmem:[%s182 + $0x5a0] sm:$0xff]
        %v381 = vld [vmem:[%s182 + $0x5a8] sm:$0xff]
        %v382 = vld [vmem:[%s182 + $0x5b0] sm:$0xff]
        %v383 = vld [vmem:[%s182 + $0x5b8] sm:$0xff]
        %v384 = vld [vmem:[%s182 + $0x5c0] sm:$0xff]
        %v385 = vld [vmem:[%s182 + $0x5c8] sm:$0xff]
        %v386 = vld [vmem:[%s182 + $0x5d0] sm:$0xff]
        %v387 = vld [vmem:[%s182 + $0x5d8] sm:$0xff]
        %v388 = vld [vmem:[%s182 + $0x5e0] sm:$0xff]
        %v389 = vld [vmem:[%s182 + $0x5e8] sm:$0xff]
        %v390 = vld [vmem:[%s182 + $0x5f0] sm:$0xff]
        %v391 = vld [vmem:[%s182 + $0x5f8] sm:$0xff]
        %v392 = vld [vmem:[%s182 + $0x600] sm:$0xff]
        %v393 = vld [vmem:[%s182 + $0x608] sm:$0xff]
        %v394 = vld [vmem:[%s182 + $0x610] sm:$0xff]
        %v395 = vld [vmem:[%s182 + $0x618] sm:$0xff]
        %v396 = vld [vmem:[%s182 + $0x620] sm:$0xff]
        %v397 = vld [vmem:[%s182 + $0x628] sm:$0xff]
        %v398 = vld [vmem:[%s182 + $0x630] sm:$0xff]
        %v399 = vld [vmem:[%s182 + $0x638] sm:$0xff]
        %v400 = vld [vmem:[%s182 + $0x640] sm:$0xff]
        %v401 = vld [vmem:[%s182 + $0x648] sm:$0xff]
        %v402 = vld [vmem:[%s182 + $0x650] sm:$0xff]
        %v403 = vld [vmem:[%s182 + $0x658] sm:$0xff]
        %v404 = vld [vmem:[%s182 + $0x660] sm:$0xff]
        %v405 = vld [vmem:[%s182 + $0x668] sm:$0xff]
        %v406 = vld [vmem:[%s182 + $0x670] sm:$0xff]
        %v407 = vld [vmem:[%s182 + $0x678] sm:$0xff]
        %v408 = vld [vmem:[%s182 + $0x680] sm:$0xff]
        %v409 = vld [vmem:[%s182 + $0x688] sm:$0xff]
        %v410 = vld [vmem:[%s182 + $0x690] sm:$0xff]
        %v411 = vld [vmem:[%s182 + $0x698] sm:$0xff]
        %v412 = vld [vmem:[%s182 + $0x6a0] sm:$0xff]
        %v413 = vld [vmem:[%s182 + $0x6a8] sm:$0xff]
        %v414 = vld [vmem:[%s182 + $0x6b0] sm:$0xff]
        %v415 = vld [vmem:[%s182 + $0x6b8] sm:$0xff]
        %v416 = vld [vmem:[%s182 + $0x6c0] sm:$0xff]
        %v417 = vld [vmem:[%s182 + $0x6c8] sm:$0xff]
        %v418 = vld [vmem:[%s182 + $0x6d0] sm:$0xff]
        %v419 = vld [vmem:[%s182 + $0x6d8] sm:$0xff]
        %v420 = vld [vmem:[%s182 + $0x6e0] sm:$0xff]
        %v421 = vld [vmem:[%s182 + $0x6e8] sm:$0xff]
        %v422 = vld [vmem:[%s182 + $0x6f0] sm:$0xff]
        %v423 = vld [vmem:[%s182 + $0x6f8] sm:$0xff]
        %v424 = vld [vmem:[%s182 + $0x700] sm:$0xff]
        %v425 = vld [vmem:[%s182 + $0x708] sm:$0xff]
        %v426 = vld [vmem:[%s182 + $0x710] sm:$0xff]
        %v427 = vld [vmem:[%s182 + $0x718] sm:$0xff]
        %v428 = vld [vmem:[%s182 + $0x720] sm:$0xff]
        %v429 = vld [vmem:[%s182 + $0x728] sm:$0xff]
        %v430 = vld [vmem:[%s182 + $0x730] sm:$0xff]
        %v431 = vld [vmem:[%s182 + $0x738] sm:$0xff]
        %v432 = vld [vmem:[%s182 + $0x740] sm:$0xff]
        %v433 = vld [vmem:[%s182 + $0x748] sm:$0xff]
        %v434 = vld [vmem:[%s182 + $0x750] sm:$0xff]
        %v435 = vld [vmem:[%s182 + $0x758] sm:$0xff]
        %v436 = vld [vmem:[%s182 + $0x760] sm:$0xff]
        %v437 = vld [vmem:[%s182 + $0x768] sm:$0xff]
        %v438 = vld [vmem:[%s182 + $0x770] sm:$0xff]
        %v439 = vld [vmem:[%s182 + $0x778] sm:$0xff]
        %v440 = vld [vmem:[%s182 + $0x780] sm:$0xff]
        %v441 = vld [vmem:[%s182 + $0x788] sm:$0xff]
        %v442 = vld [vmem:[%s182 + $0x790] sm:$0xff]
        %v443 = vld [vmem:[%s182 + $0x798] sm:$0xff]
        %v444 = vld [vmem:[%s182 + $0x7a0] sm:$0xff]
        %v445 = vld [vmem:[%s182 + $0x7a8] sm:$0xff]
        %v446 = vld [vmem:[%s182 + $0x7b0] sm:$0xff]
        %v447 = vld [vmem:[%s182 + $0x7b8] sm:$0xff]
        %v448 = vld [vmem:[%s182 + $0x7c0] sm:$0xff]
        %v449 = vld [vmem:[%s182 + $0x7c8] sm:$0xff]
        %v450 = vld [vmem:[%s182 + $0x7d0] sm:$0xff]
        %v451 = vld [vmem:[%s182 + $0x7d8] sm:$0xff]
        %v452 = vld [vmem:[%s182 + $0x7e0] sm:$0xff]
        %v453 = vld [vmem:[%s182 + $0x7e8] sm:$0xff]
        %v454 = vld [vmem:[%s182 + $0x7f0] sm:$0xff]
        %v455 = vld [vmem:[%s182 + $0x7f8] sm:$0xff]
        %v456 = vld [vmem:[%s182 + $0x800] sm:$0xff]
        %v457 = vld [vmem:[%s182 + $0x808] sm:$0xff]
        %v458 = vld [vmem:[%s182 + $0x810] sm:$0xff]
        %v459 = vld [vmem:[%s182 + $0x818] sm:$0xff]
        %v460 = vld [vmem:[%s182 + $0x820] sm:$0xff]
        %v461 = vld [vmem:[%s182 + $0x828] sm:$0xff]
        %v462 = vld [vmem:[%s182 + $0x830] sm:$0xff]
        %v463 = vld [vmem:[%s182 + $0x838] sm:$0xff]
        %v464 = vld [vmem:[%s182 + $0x840] sm:$0xff]
        %v465 = vld [vmem:[%s182 + $0x848] sm:$0xff]
        %v466 = vld [vmem:[%s182 + $0x850] sm:$0xff]
        %v467 = vld [vmem:[%s182 + $0x858] sm:$0xff]
        %v468 = vld [vmem:[%s182 + $0x860] sm:$0xff]
        %v469 = vld [vmem:[%s182 + $0x868] sm:$0xff]
        %v470 = vld [vmem:[%s182 + $0x870] sm:$0xff]
        %v471 = vld [vmem:[%s182 + $0x878] sm:$0xff]
        %v472 = vld [vmem:[%s182 + $0x880] sm:$0xff]
        %v473 = vld [vmem:[%s182 + $0x888] sm:$0xff]
        %v474 = vld [vmem:[%s182 + $0x890] sm:$0xff]
        %v475 = vld [vmem:[%s182 + $0x898] sm:$0xff]
        %v476 = vld [vmem:[%s182 + $0x8a0] sm:$0xff]
        %v477 = vld [vmem:[%s182 + $0x8a8] sm:$0xff]
        %v478 = vld [vmem:[%s182 + $0x8b0] sm:$0xff]
        %v479 = vld [vmem:[%s182 + $0x8b8] sm:$0xff]
        %v480 = vld [vmem:[%s182 + $0x8c0] sm:$0xff]
        %v481 = vld [vmem:[%s182 + $0x8c8] sm:$0xff]
        %v482 = vld [vmem:[%s182 + $0x8d0] sm:$0xff]
        %v483 = vld [vmem:[%s182 + $0x8d8] sm:$0xff]
        %v484 = vld [vmem:[%s182 + $0x8e0] sm:$0xff]
        %v485 = vld [vmem:[%s182 + $0x8e8] sm:$0xff]
        %v486 = vld [vmem:[%s182 + $0x8f0] sm:$0xff]
        %v487 = vld [vmem:[%s182 + $0x8f8] sm:$0xff]
        %v488 = vld [vmem:[%s182 + $0x900] sm:$0xff]
        %v489 = vld [vmem:[%s182 + $0x908] sm:$0xff]
        %v490 = vld [vmem:[%s182 + $0x910] sm:$0xff]
        %v491 = vld [vmem:[%s182 + $0x918] sm:$0xff]
        %v492 = vld [vmem:[%s182 + $0x920] sm:$0xff]
        %v493 = vld [vmem:[%s182 + $0x928] sm:$0xff]
        %v494 = vld [vmem:[%s182 + $0x930] sm:$0xff]
        %v495 = vld [vmem:[%s182 + $0x938] sm:$0xff]
        %v496 = vld [vmem:[%s182 + $0x940] sm:$0xff]
        %v497 = vld [vmem:[%s182 + $0x948] sm:$0xff]
        %v498 = vld [vmem:[%s182 + $0x950] sm:$0xff]
        %v499 = vld [vmem:[%s182 + $0x958] sm:$0xff]
        %v500 = vld [vmem:[%s182 + $0x960] sm:$0xff]
        %v501 = vld [vmem:[%s182 + $0x968] sm:$0xff]
        %v502 = vld [vmem:[%s182 + $0x970] sm:$0xff]
        %v503 = vld [vmem:[%s182 + $0x978] sm:$0xff]
        %v504 = vld [vmem:[%s182 + $0x980] sm:$0xff]
        %v505 = vld [vmem:[%s182 + $0x988] sm:$0xff]
        %v506 = vld [vmem:[%s182 + $0x990] sm:$0xff]
        %v507 = vld [vmem:[%s182 + $0x998] sm:$0xff]
        %v508 = vld [vmem:[%s182 + $0x9a0] sm:$0xff]
        %v509 = vld [vmem:[%s182 + $0x9a8] sm:$0xff]
        %v510 = vld [vmem:[%s182 + $0x9b0] sm:$0xff]
        %v511 = vld [vmem:[%s182 + $0x9b8] sm:$0xff]
        %v512 = vld [vmem:[%s182 + $0x9c0] sm:$0xff]
        %v513 = vld [vmem:[%s182 + $0x9c8] sm:$0xff]
        %v514 = vld [vmem:[%s182 + $0x9d0] sm:$0xff]
        %v515 = vld [vmem:[%s182 + $0x9d8] sm:$0xff]
        %v516 = vld [vmem:[%s182 + $0x9e0] sm:$0xff]
        %v517 = vld [vmem:[%s182 + $0x9e8] sm:$0xff]
        %v518 = vld [vmem:[%s182 + $0x9f0] sm:$0xff]
        %v519 = vld [vmem:[%s182 + $0x9f8] sm:$0xff]
        %v520 = vld [vmem:[%s182 + $0xa00] sm:$0xff]
        %v521 = vld [vmem:[%s182 + $0xa08] sm:$0xff]
        %v522 = vld [vmem:[%s182 + $0xa10] sm:$0xff]
        %v523 = vld [vmem:[%s182 + $0xa18] sm:$0xff]
        %v524 = vld [vmem:[%s182 + $0xa20] sm:$0xff]
        %v525 = vld [vmem:[%s182 + $0xa28] sm:$0xff]
        %v526 = vld [vmem:[%s182 + $0xa30] sm:$0xff]
        %v527 = vld [vmem:[%s182 + $0xa38] sm:$0xff]
        %v528 = vld [vmem:[%s182 + $0xa40] sm:$0xff]
        %v529 = vld [vmem:[%s182 + $0xa48] sm:$0xff]
        %v530 = vld [vmem:[%s182 + $0xa50] sm:$0xff]
        %v531 = vld [vmem:[%s182 + $0xa58] sm:$0xff]
        %v532 = vld [vmem:[%s182 + $0xa60] sm:$0xff]
        %v533 = vld [vmem:[%s182 + $0xa68] sm:$0xff]
        %v534 = vld [vmem:[%s182 + $0xa70] sm:$0xff]
        %v535 = vld [vmem:[%s182 + $0xa78] sm:$0xff]
        %v536 = vld [vmem:[%s182 + $0xa80] sm:$0xff]
        %v537 = vld [vmem:[%s182 + $0xa88] sm:$0xff]
        %v538 = vld [vmem:[%s182 + $0xa90] sm:$0xff]
        %v539 = vld [vmem:[%s182 + $0xa98] sm:$0xff]
        %v540 = vld [vmem:[%s182 + $0xaa0] sm:$0xff]
        %v541 = vld [vmem:[%s182 + $0xaa8] sm:$0xff]
        %v542 = vld [vmem:[%s182 + $0xab0] sm:$0xff]
        %v543 = vld [vmem:[%s182 + $0xab8] sm:$0xff]
        %v544 = vld [vmem:[%s182 + $0xac0] sm:$0xff]
        %v545 = vld [vmem:[%s182 + $0xac8] sm:$0xff]
        %v546 = vld [vmem:[%s182 + $0xad0] sm:$0xff]
        %v547 = vld [vmem:[%s182 + $0xad8] sm:$0xff]
        %v548 = vld [vmem:[%s182 + $0xae0] sm:$0xff]
        %v549 = vld [vmem:[%s182 + $0xae8] sm:$0xff]
        %v550 = vld [vmem:[%s182 + $0xaf0] sm:$0xff]
        %v551 = vld [vmem:[%s182 + $0xaf8] sm:$0xff]
        %v552 = vld [vmem:[%s182 + $0xb00] sm:$0xff]
        %v553 = vld [vmem:[%s182 + $0xb08] sm:$0xff]
        %v554 = vld [vmem:[%s182 + $0xb10] sm:$0xff]
        %v555 = vld [vmem:[%s182 + $0xb18] sm:$0xff]
        %v556 = vld [vmem:[%s182 + $0xb20] sm:$0xff]
        %v557 = vld [vmem:[%s182 + $0xb28] sm:$0xff]
        %v558 = vld [vmem:[%s182 + $0xb30] sm:$0xff]
        %v559 = vld [vmem:[%s182 + $0xb38] sm:$0xff]
        %v560 = vld [vmem:[%s182 + $0xb40] sm:$0xff]
        %v561 = vld [vmem:[%s182 + $0xb48] sm:$0xff]
        %v562 = vld [vmem:[%s182 + $0xb50] sm:$0xff]
        %v563 = vld [vmem:[%s182 + $0xb58] sm:$0xff]
        %v564 = vld [vmem:[%s182 + $0xb60] sm:$0xff]
        %v565 = vld [vmem:[%s182 + $0xb68] sm:$0xff]
        %v566 = vld [vmem:[%s182 + $0xb70] sm:$0xff]
        %v567 = vld [vmem:[%s182 + $0xb78] sm:$0xff]
        %v568 = vld [vmem:[%s182 + $0xb80] sm:$0xff]
        %v569 = vld [vmem:[%s182 + $0xb88] sm:$0xff]
        %v570 = vld [vmem:[%s182 + $0xb90] sm:$0xff]
        %v571 = vld [vmem:[%s182 + $0xb98] sm:$0xff]
        %v572 = vld [vmem:[%s182 + $0xba0] sm:$0xff]
        %v573 = vld [vmem:[%s182 + $0xba8] sm:$0xff]
        %v574 = vld [vmem:[%s182 + $0xbb0] sm:$0xff]
        %v575 = vld [vmem:[%s182 + $0xbb8] sm:$0xff]
        %v576 = vld [vmem:[%s182 + $0xbc0] sm:$0xff]
        %v577 = vld [vmem:[%s182 + $0xbc8] sm:$0xff]
        %v578 = vld [vmem:[%s182 + $0xbd0] sm:$0xff]
        %v579 = vld [vmem:[%s182 + $0xbd8] sm:$0xff]
        %v580 = vld [vmem:[%s182 + $0xbe0] sm:$0xff]
        %v581 = vld [vmem:[%s182 + $0xbe8] sm:$0xff]
        %v582 = vld [vmem:[%s182 + $0xbf0] sm:$0xff]
        %v583 = vld [vmem:[%s182 + $0xbf8] sm:$0xff]
        %v584 = vld [vmem:[%s182 + $0xc00] sm:$0xff]
        %v585 = vld [vmem:[%s182 + $0xc08] sm:$0xff]
        %v586 = vld [vmem:[%s182 + $0xc10] sm:$0xff]
        %v587 = vld [vmem:[%s182 + $0xc18] sm:$0xff]
        %v588 = vld [vmem:[%s182 + $0xc20] sm:$0xff]
        %v589 = vld [vmem:[%s182 + $0xc28] sm:$0xff]
        %v590 = vld [vmem:[%s182 + $0xc30] sm:$0xff]
        %v591 = vld [vmem:[%s182 + $0xc38] sm:$0xff]
        %v592 = vld [vmem:[%s182 + $0xc40] sm:$0xff]
        %v593 = vld [vmem:[%s182 + $0xc48] sm:$0xff]
        %v594 = vld [vmem:[%s182 + $0xc50] sm:$0xff]
        %v595 = vld [vmem:[%s182 + $0xc58] sm:$0xff]
        %v596 = vld [vmem:[%s182 + $0xc60] sm:$0xff]
        %v597 = vld [vmem:[%s182 + $0xc68] sm:$0xff]
        %v598 = vld [vmem:[%s182 + $0xc70] sm:$0xff]
        %v599 = vld [vmem:[%s182 + $0xc78] sm:$0xff]
        %v600 = vld [vmem:[%s182 + $0xc80] sm:$0xff]
        %v601 = vld [vmem:[%s182 + $0xc88] sm:$0xff]
        %v602 = vld [vmem:[%s182 + $0xc90] sm:$0xff]
        %v603 = vld [vmem:[%s182 + $0xc98] sm:$0xff]
        %v604 = vld [vmem:[%s182 + $0xca0] sm:$0xff]
        %v605 = vld [vmem:[%s182 + $0xca8] sm:$0xff]
        %v606 = vld [vmem:[%s182 + $0xcb0] sm:$0xff]
        %v607 = vld [vmem:[%s182 + $0xcb8] sm:$0xff]
        %v608 = vld [vmem:[%s182 + $0xcc0] sm:$0xff]
        %v609 = vld [vmem:[%s182 + $0xcc8] sm:$0xff]
        %v610 = vld [vmem:[%s182 + $0xcd0] sm:$0xff]
        %v611 = vld [vmem:[%s182 + $0xcd8] sm:$0xff]
        %v612 = vld [vmem:[%s182 + $0xce0] sm:$0xff]
        %v613 = vld [vmem:[%s182 + $0xce8] sm:$0xff]
        %v614 = vld [vmem:[%s182 + $0xcf0] sm:$0xff]
        %v615 = vld [vmem:[%s182 + $0xcf8] sm:$0xff]
        %v616 = vld [vmem:[%s182 + $0xd00] sm:$0xff]
        %v617 = vld [vmem:[%s182 + $0xd08] sm:$0xff]
        %v618 = vld [vmem:[%s182 + $0xd10] sm:$0xff]
        %v619 = vld [vmem:[%s182 + $0xd18] sm:$0xff]
        %v620 = vld [vmem:[%s182 + $0xd20] sm:$0xff]
        %v621 = vld [vmem:[%s182 + $0xd28] sm:$0xff]
        %v622 = vld [vmem:[%s182 + $0xd30] sm:$0xff]
        %v623 = vld [vmem:[%s182 + $0xd38] sm:$0xff]
        %v624 = vld [vmem:[%s182 + $0xd40] sm:$0xff]
        %v625 = vld [vmem:[%s182 + $0xd48] sm:$0xff]
        %v626 = vld [vmem:[%s182 + $0xd50] sm:$0xff]
        %v627 = vld [vmem:[%s182 + $0xd58] sm:$0xff]
        %v628 = vld [vmem:[%s182 + $0xd60] sm:$0xff]
        %v629 = vld [vmem:[%s182 + $0xd68] sm:$0xff]
        %v630 = vld [vmem:[%s182 + $0xd70] sm:$0xff]
        %v631 = vld [vmem:[%s182 + $0xd78] sm:$0xff]
        %v632 = vld [vmem:[%s182 + $0xd80] sm:$0xff]
        %v633 = vld [vmem:[%s182 + $0xd88] sm:$0xff]
        %v634 = vld [vmem:[%s182 + $0xd90] sm:$0xff]
        %v635 = vld [vmem:[%s182 + $0xd98] sm:$0xff]
        %v636 = vld [vmem:[%s182 + $0xda0] sm:$0xff]
        %v637 = vld [vmem:[%s182 + $0xda8] sm:$0xff]
        %v638 = vld [vmem:[%s182 + $0xdb0] sm:$0xff]
        %v639 = vld [vmem:[%s182 + $0xdb8] sm:$0xff]
        %v640 = vld [vmem:[%s182 + $0xdc0] sm:$0xff]
        %v641 = vld [vmem:[%s182 + $0xdc8] sm:$0xff]
        %v642 = vld [vmem:[%s182 + $0xdd0] sm:$0xff]
        %v643 = vld [vmem:[%s182 + $0xdd8] sm:$0xff]
        %v644 = vld [vmem:[%s182 + $0xde0] sm:$0xff]
        %v645 = vld [vmem:[%s182 + $0xde8] sm:$0xff]
        %v646 = vld [vmem:[%s182 + $0xdf0] sm:$0xff]
        %v647 = vld [vmem:[%s182 + $0xdf8] sm:$0xff]
        %v648 = vld [vmem:[%s182 + $0xe00] sm:$0xff]
        %v649 = vld [vmem:[%s182 + $0xe08] sm:$0xff]
        %v650 = vld [vmem:[%s182 + $0xe10] sm:$0xff]
        %v651 = vld [vmem:[%s182 + $0xe18] sm:$0xff]
        %v652 = vld [vmem:[%s182 + $0xe20] sm:$0xff]
        %v653 = vld [vmem:[%s182 + $0xe28] sm:$0xff]
        %v654 = vld [vmem:[%s182 + $0xe30] sm:$0xff]
        %v655 = vld [vmem:[%s182 + $0xe38] sm:$0xff]
        %v656 = vld [vmem:[%s182 + $0xe40] sm:$0xff]
        %v657 = vld [vmem:[%s182 + $0xe48] sm:$0xff]
        %v658 = vld [vmem:[%s182 + $0xe50] sm:$0xff]
        %v659 = vld [vmem:[%s182 + $0xe58] sm:$0xff]
        %v660 = vld [vmem:[%s182 + $0xe60] sm:$0xff]
        %v661 = vld [vmem:[%s182 + $0xe68] sm:$0xff]
        %v662 = vld [vmem:[%s182 + $0xe70] sm:$0xff]
        %v663 = vld [vmem:[%s182 + $0xe78] sm:$0xff]
        %v664 = vld [vmem:[%s182 + $0xe80] sm:$0xff]
        %v665 = vld [vmem:[%s182 + $0xe88] sm:$0xff]
        %v666 = vld [vmem:[%s182 + $0xe90] sm:$0xff]
        %v667 = vld [vmem:[%s182 + $0xe98] sm:$0xff]
        %v668 = vld [vmem:[%s182 + $0xea0] sm:$0xff]
        %v669 = vld [vmem:[%s182 + $0xea8] sm:$0xff]
        %v670 = vld [vmem:[%s182 + $0xeb0] sm:$0xff]
        %v671 = vld [vmem:[%s182 + $0xeb8] sm:$0xff]
        %v672 = vld [vmem:[%s182 + $0xec0] sm:$0xff]
        %v673 = vld [vmem:[%s182 + $0xec8] sm:$0xff]
        %v674 = vld [vmem:[%s182 + $0xed0] sm:$0xff]
        %v675 = vld [vmem:[%s182 + $0xed8] sm:$0xff]
        %v676 = vld [vmem:[%s182 + $0xee0] sm:$0xff]
        %v677 = vld [vmem:[%s182 + $0xee8] sm:$0xff]
        %v678 = vld [vmem:[%s182 + $0xef0] sm:$0xff]
        %v679 = vld [vmem:[%s182 + $0xef8] sm:$0xff]
        %v680 = vld [vmem:[%s182 + $0xf00] sm:$0xff]
        %v681 = vld [vmem:[%s182 + $0xf08] sm:$0xff]
        %v682 = vld [vmem:[%s182 + $0xf10] sm:$0xff]
        %v683 = vld [vmem:[%s182 + $0xf18] sm:$0xff]
        %v684 = vld [vmem:[%s182 + $0xf20] sm:$0xff]
        %v685 = vld [vmem:[%s182 + $0xf28] sm:$0xff]
        %v686 = vld [vmem:[%s182 + $0xf30] sm:$0xff]
        %v687 = vld [vmem:[%s182 + $0xf38] sm:$0xff]
        %v688 = vld [vmem:[%s182 + $0xf40] sm:$0xff]
        %v689 = vld [vmem:[%s182 + $0xf48] sm:$0xff]
        %v690 = vld [vmem:[%s182 + $0xf50] sm:$0xff]
        %v691 = vld [vmem:[%s182 + $0xf58] sm:$0xff]
        %v692 = vld [vmem:[%s182 + $0xf60] sm:$0xff]
        %v693 = vld [vmem:[%s182 + $0xf68] sm:$0xff]
        %v694 = vld [vmem:[%s182 + $0xf70] sm:$0xff]
        %v695 = vld [vmem:[%s182 + $0xf78] sm:$0xff]
        %v696 = vld [vmem:[%s182 + $0xf80] sm:$0xff]
        %v697 = vld [vmem:[%s182 + $0xf88] sm:$0xff]
        %v698 = vld [vmem:[%s182 + $0xf90] sm:$0xff]
        %v699 = vld [vmem:[%s182 + $0xf98] sm:$0xff]
        %v700 = vld [vmem:[%s182 + $0xfa0] sm:$0xff]
        %v701 = vld [vmem:[%s182 + $0xfa8] sm:$0xff]
        %v702 = vld [vmem:[%s182 + $0xfb0] sm:$0xff]
        %v703 = vld [vmem:[%s182 + $0xfb8] sm:$0xff]
        %v704 = vld [vmem:[%s182 + $0xfc0] sm:$0xff]
        %v705 = vld [vmem:[%s182 + $0xfc8] sm:$0xff]
        %v706 = vld [vmem:[%s182 + $0xfd0] sm:$0xff]
        %v707 = vld [vmem:[%s182 + $0xfd8] sm:$0xff]
        %v708 = vld [vmem:[%s182 + $0xfe0] sm:$0xff]
        %v709 = vld [vmem:[%s182 + $0xfe8] sm:$0xff]
        %v710 = vld [vmem:[%s182 + $0xff0] sm:$0xff]
        %v711 = vld [vmem:[%s182 + $0xff8] sm:$0xff]
        %v712 = vld [vmem:[%s182 + $0x1000] sm:$0xff]
        %v713 = vld [vmem:[%s182 + $0x1008] sm:$0xff]
        %v714 = vld [vmem:[%s182 + $0x1010] sm:$0xff]
        %v715 = vld [vmem:[%s182 + $0x1018] sm:$0xff]
        %v716 = vld [vmem:[%s182 + $0x1020] sm:$0xff]
        %v717 = vld [vmem:[%s182 + $0x1028] sm:$0xff]
        %v718 = vld [vmem:[%s182 + $0x1030] sm:$0xff]
        %v719 = vld [vmem:[%s182 + $0x1038] sm:$0xff]
        %v720 = vld [vmem:[%s182 + $0x1040] sm:$0xff]
        %v721 = vld [vmem:[%s182 + $0x1048] sm:$0xff]
        %v722 = vld [vmem:[%s182 + $0x1050] sm:$0xff]
        %v723 = vld [vmem:[%s182 + $0x1058] sm:$0xff]
        %v724 = vld [vmem:[%s182 + $0x1060] sm:$0xff]
        %v725 = vld [vmem:[%s182 + $0x1068] sm:$0xff]
        %v726 = vld [vmem:[%s182 + $0x1070] sm:$0xff]
        %v727 = vld [vmem:[%s182 + $0x1078] sm:$0xff]
        %v728 = vld [vmem:[%s182 + $0x1080] sm:$0xff]
        %v729 = vld [vmem:[%s182 + $0x1088] sm:$0xff]
        %v730 = vld [vmem:[%s182 + $0x1090] sm:$0xff]
        %v731 = vld [vmem:[%s182 + $0x1098] sm:$0xff]
        %v732 = vld [vmem:[%s182 + $0x10a0] sm:$0xff]
        %v733 = vld [vmem:[%s182 + $0x10a8] sm:$0xff]
        %v734 = vld [vmem:[%s182 + $0x10b0] sm:$0xff]
        %v735 = vld [vmem:[%s182 + $0x10b8] sm:$0xff]
        %v736 = vld [vmem:[%s182 + $0x10c0] sm:$0xff]
        %v737 = vld [vmem:[%s182 + $0x10c8] sm:$0xff]
        %v738 = vld [vmem:[%s182 + $0x10d0] sm:$0xff]
        %v739 = vld [vmem:[%s182 + $0x10d8] sm:$0xff]
        %v740 = vld [vmem:[%s182 + $0x10e0] sm:$0xff]
        %v741 = vld [vmem:[%s182 + $0x10e8] sm:$0xff]
        %v742 = vld [vmem:[%s182 + $0x10f0] sm:$0xff]
        %v743 = vld [vmem:[%s182 + $0x10f8] sm:$0xff]
        %v744 = vld [vmem:[%s182 + $0x1100] sm:$0xff]
        %v745 = vld [vmem:[%s182 + $0x1108] sm:$0xff]
        %v746 = vld [vmem:[%s182 + $0x1110] sm:$0xff]
        %v747 = vld [vmem:[%s182 + $0x1118] sm:$0xff]
        %v748 = vld [vmem:[%s182 + $0x1120] sm:$0xff]
        %v749 = vld [vmem:[%s182 + $0x1128] sm:$0xff]
        %v750 = vld [vmem:[%s182 + $0x1130] sm:$0xff]
        %v751 = vld [vmem:[%s182 + $0x1138] sm:$0xff]
        %v752 = vld [vmem:[%s182 + $0x1140] sm:$0xff]
        %v753 = vld [vmem:[%s182 + $0x1148] sm:$0xff]
        %v754 = vld [vmem:[%s182 + $0x1150] sm:$0xff]
        %v755 = vld [vmem:[%s182 + $0x1158] sm:$0xff]
        %v756 = vld [vmem:[%s182 + $0x1160] sm:$0xff]
        %v757 = vld [vmem:[%s182 + $0x1168] sm:$0xff]
        %v758 = vld [vmem:[%s182 + $0x1170] sm:$0xff]
        %v759 = vld [vmem:[%s182 + $0x1178] sm:$0xff]
        %v760 = vld [vmem:[%s182 + $0x1180] sm:$0xff]
        %v761 = vld [vmem:[%s182 + $0x1188] sm:$0xff]
        %v762 = vld [vmem:[%s182 + $0x1190] sm:$0xff]
        %v763 = vld [vmem:[%s182 + $0x1198] sm:$0xff]
        %v764 = vld [vmem:[%s182 + $0x11a0] sm:$0xff]
        %v765 = vld [vmem:[%s182 + $0x11a8] sm:$0xff]
        %v766 = vld [vmem:[%s182 + $0x11b0] sm:$0xff]
        %v767 = vld [vmem:[%s182 + $0x11b8] sm:$0xff]
        %v768 = vld [vmem:[%s182 + $0x11c0] sm:$0xff]
        %v769 = vld [vmem:[%s182 + $0x11c8] sm:$0xff]
        %v770 = vld [vmem:[%s182 + $0x11d0] sm:$0xff]
        %v771 = vld [vmem:[%s182 + $0x11d8] sm:$0xff]
        %v772 = vld [vmem:[%s182 + $0x11e0] sm:$0xff]
        %v773 = vld [vmem:[%s182 + $0x11e8] sm:$0xff]
        %v774 = vld [vmem:[%s182 + $0x11f0] sm:$0xff]
        %v775 = vld [vmem:[%s182 + $0x11f8] sm:$0xff]
        %v776 = vld [vmem:[%s182 + $0x1200] sm:$0xff]
        %v777 = vld [vmem:[%s182 + $0x1208] sm:$0xff]
        %v778 = vld [vmem:[%s182 + $0x1210] sm:$0xff]
        %v779 = vld [vmem:[%s182 + $0x1218] sm:$0xff]
        %v780 = vld [vmem:[%s182 + $0x1220] sm:$0xff]
        %v781 = vld [vmem:[%s182 + $0x1228] sm:$0xff]
        %v782 = vld [vmem:[%s182 + $0x1230] sm:$0xff]
        %v783 = vld [vmem:[%s182 + $0x1238] sm:$0xff]
        %v784 = vld [vmem:[%s182 + $0x1240] sm:$0xff]
        %v785 = vld [vmem:[%s182 + $0x1248] sm:$0xff]
        %v786 = vld [vmem:[%s182 + $0x1250] sm:$0xff]
        %v787 = vld [vmem:[%s182 + $0x1258] sm:$0xff]
        %v788 = vld [vmem:[%s182 + $0x1260] sm:$0xff]
        %v789 = vld [vmem:[%s182 + $0x1268] sm:$0xff]
        %v790 = vld [vmem:[%s182 + $0x1270] sm:$0xff]
        %v791 = vld [vmem:[%s182 + $0x1278] sm:$0xff]
        %v792 = vld [vmem:[%s182 + $0x1280] sm:$0xff]
        %v793 = vld [vmem:[%s182 + $0x1288] sm:$0xff]
        %v794 = vld [vmem:[%s182 + $0x1290] sm:$0xff]
        %v795 = vld [vmem:[%s182 + $0x1298] sm:$0xff]
        %v796 = vld [vmem:[%s182 + $0x12a0] sm:$0xff]
        %v797 = vld [vmem:[%s182 + $0x12a8] sm:$0xff]
        %v798 = vld [vmem:[%s182 + $0x12b0] sm:$0xff]
        %v799 = vld [vmem:[%s182 + $0x12b8] sm:$0xff]
        %v800 = vld [vmem:[%s182 + $0x12c0] sm:$0xff]
        %v801 = vld [vmem:[%s182 + $0x12c8] sm:$0xff]
        %v802 = vld [vmem:[%s182 + $0x12d0] sm:$0xff]
        %v803 = vld [vmem:[%s182 + $0x12d8] sm:$0xff]
        %v804 = vld [vmem:[%s182 + $0x12e0] sm:$0xff]
        %v805 = vld [vmem:[%s182 + $0x12e8] sm:$0xff]
        %v806 = vld [vmem:[%s182 + $0x12f0] sm:$0xff]
        %v807 = vld [vmem:[%s182 + $0x12f8] sm:$0xff]
        %v808 = vld [vmem:[%s182 + $0x1300] sm:$0xff]
        %v809 = vld [vmem:[%s182 + $0x1308] sm:$0xff]
        %v810 = vld [vmem:[%s182 + $0x1310] sm:$0xff]
        %v811 = vld [vmem:[%s182 + $0x1318] sm:$0xff]
        %v812 = vld [vmem:[%s182 + $0x1320] sm:$0xff]
        %v813 = vld [vmem:[%s182 + $0x1328] sm:$0xff]
        %v814 = vld [vmem:[%s182 + $0x1330] sm:$0xff]
        %v815 = vld [vmem:[%s182 + $0x1338] sm:$0xff]
        %v816 = vld [vmem:[%s182 + $0x1340] sm:$0xff]
        %v817 = vld [vmem:[%s182 + $0x1348] sm:$0xff]
        %v818 = vld [vmem:[%s182 + $0x1350] sm:$0xff]
        %v819 = vld [vmem:[%s182 + $0x1358] sm:$0xff]
        %v820 = vld [vmem:[%s182 + $0x1360] sm:$0xff]
        %v821 = vld [vmem:[%s182 + $0x1368] sm:$0xff]
        %v822 = vld [vmem:[%s182 + $0x1370] sm:$0xff]
        %v823 = vld [vmem:[%s182 + $0x1378] sm:$0xff]
        %v824 = vld [vmem:[%s182 + $0x1380] sm:$0xff]
        %v825 = vld [vmem:[%s182 + $0x1388] sm:$0xff]
        %v826 = vld [vmem:[%s182 + $0x1390] sm:$0xff]
        %v827 = vld [vmem:[%s182 + $0x1398] sm:$0xff]
        %v828 = vld [vmem:[%s182 + $0x13a0] sm:$0xff]
        %v829 = vld [vmem:[%s182 + $0x13a8] sm:$0xff]
        %v830 = vld [vmem:[%s182 + $0x13b0] sm:$0xff]
        %v831 = vld [vmem:[%s182 + $0x13b8] sm:$0xff]
        %v832 = vld [vmem:[%s182 + $0x13c0] sm:$0xff]
        %v833 = vld [vmem:[%s182 + $0x13c8] sm:$0xff]
        %v834 = vld [vmem:[%s182 + $0x13d0] sm:$0xff]
        %v835 = vld [vmem:[%s182 + $0x13d8] sm:$0xff]
        %v836 = vld [vmem:[%s182 + $0x13e0] sm:$0xff]
        %v837 = vld [vmem:[%s182 + $0x13e8] sm:$0xff]
        %v838 = vld [vmem:[%s182 + $0x13f0] sm:$0xff]
        %v839 = vld [vmem:[%s182 + $0x13f8] sm:$0xff]
        %v840 = vld [vmem:[%s182 + $0x1400] sm:$0xff]
        %v841 = vld [vmem:[%s182 + $0x1408] sm:$0xff]
        %v842 = vld [vmem:[%s182 + $0x1410] sm:$0xff]
        %v843 = vld [vmem:[%s182 + $0x1418] sm:$0xff]
        %v844 = vld [vmem:[%s182 + $0x1420] sm:$0xff]
        %v845 = vld [vmem:[%s182 + $0x1428] sm:$0xff]
        %v846 = vld [vmem:[%s182 + $0x1430] sm:$0xff]
        %v847 = vld [vmem:[%s182 + $0x1438] sm:$0xff]
        %v848 = vld [vmem:[%s182 + $0x1440] sm:$0xff]
        %v849 = vld [vmem:[%s182 + $0x1448] sm:$0xff]
        %v850 = vld [vmem:[%s182 + $0x1450] sm:$0xff]
        %v851 = vld [vmem:[%s182 + $0x1458] sm:$0xff]
        %v852 = vld [vmem:[%s182 + $0x1460] sm:$0xff]
        %v853 = vld [vmem:[%s182 + $0x1468] sm:$0xff]
        %v854 = vld [vmem:[%s182 + $0x1470] sm:$0xff]
        %v855 = vld [vmem:[%s182 + $0x1478] sm:$0xff]
        %v856 = vld [vmem:[%s182 + $0x1480] sm:$0xff]
        %v857 = vld [vmem:[%s182 + $0x1488] sm:$0xff]
        %v858 = vld [vmem:[%s182 + $0x1490] sm:$0xff]
        %v859 = vld [vmem:[%s182 + $0x1498] sm:$0xff]
        %v860 = vld [vmem:[%s182 + $0x14a0] sm:$0xff]
        %v861 = vld [vmem:[%s182 + $0x14a8] sm:$0xff]
        %v862 = vld [vmem:[%s182 + $0x14b0] sm:$0xff]
        %v863 = vld [vmem:[%s182 + $0x14b8] sm:$0xff]
        %v864 = vld [vmem:[%s182 + $0x14c0] sm:$0xff]
        %v865 = vld [vmem:[%s182 + $0x14c8] sm:$0xff]
        %v866 = vld [vmem:[%s182 + $0x14d0] sm:$0xff]
        %v867 = vld [vmem:[%s182 + $0x14d8] sm:$0xff]
        %v868 = vld [vmem:[%s182 + $0x14e0] sm:$0xff]
        %v869 = vld [vmem:[%s182 + $0x14e8] sm:$0xff]
        %v870 = vld [vmem:[%s182 + $0x14f0] sm:$0xff]
        %v871 = vld [vmem:[%s182 + $0x14f8] sm:$0xff]
        %v872 = vld [vmem:[%s182 + $0x1500] sm:$0xff]
        %v873 = vld [vmem:[%s182 + $0x1508] sm:$0xff]
        %v874 = vld [vmem:[%s182 + $0x1510] sm:$0xff]
        %v875 = vld [vmem:[%s182 + $0x1518] sm:$0xff]
        %v876 = vld [vmem:[%s182 + $0x1520] sm:$0xff]
        %v877 = vld [vmem:[%s182 + $0x1528] sm:$0xff]
        %v878 = vld [vmem:[%s182 + $0x1530] sm:$0xff]
        %v879 = vld [vmem:[%s182 + $0x1538] sm:$0xff]
        %v880 = vld [vmem:[%s182 + $0x1540] sm:$0xff]
        %v881 = vld [vmem:[%s182 + $0x1548] sm:$0xff]
        %v882 = vld [vmem:[%s182 + $0x1550] sm:$0xff]
        %v883 = vld [vmem:[%s182 + $0x1558] sm:$0xff]
        %v884 = vld [vmem:[%s182 + $0x1560] sm:$0xff]
        %v885 = vld [vmem:[%s182 + $0x1568] sm:$0xff]
        %v886 = vld [vmem:[%s182 + $0x1570] sm:$0xff]
        %v887 = vld [vmem:[%s182 + $0x1578] sm:$0xff]
        %v888 = vld [vmem:[%s182 + $0x1580] sm:$0xff]
        %v889 = vld [vmem:[%s182 + $0x1588] sm:$0xff]
        %v890 = vld [vmem:[%s182 + $0x1590] sm:$0xff]
        %v891 = vld [vmem:[%s182 + $0x1598] sm:$0xff]
        %v892 = vld [vmem:[%s182 + $0x15a0] sm:$0xff]
        %v893 = vld [vmem:[%s182 + $0x15a8] sm:$0xff]
        %v894 = vld [vmem:[%s182 + $0x15b0] sm:$0xff]
        %v895 = vld [vmem:[%s182 + $0x15b8] sm:$0xff]
        %v896 = vld [vmem:[%s182 + $0x15c0] sm:$0xff]
        %v897 = vld [vmem:[%s182 + $0x15c8] sm:$0xff]
        %v898 = vld [vmem:[%s182 + $0x15d0] sm:$0xff]
        %v899 = vld [vmem:[%s182 + $0x15d8] sm:$0xff]
        %v900 = vld [vmem:[%s182 + $0x15e0] sm:$0xff]
        %v901 = vld [vmem:[%s182 + $0x15e8] sm:$0xff]
        %v902 = vld [vmem:[%s182 + $0x15f0] sm:$0xff]
        %v903 = vld [vmem:[%s182 + $0x15f8] sm:$0xff]
        %v904 = vld [vmem:[%s182 + $0x1600] sm:$0xff]
        %v905 = vld [vmem:[%s182 + $0x1608] sm:$0xff]
        %v906 = vld [vmem:[%s182 + $0x1610] sm:$0xff]
        %v907 = vld [vmem:[%s182 + $0x1618] sm:$0xff]
        %v908 = vld [vmem:[%s182 + $0x1620] sm:$0xff]
        %v909 = vld [vmem:[%s182 + $0x1628] sm:$0xff]
        %v910 = vld [vmem:[%s182 + $0x1630] sm:$0xff]
        %v911 = vld [vmem:[%s182 + $0x1638] sm:$0xff]
        %v912 = vld [vmem:[%s182 + $0x1640] sm:$0xff]
        %v913 = vld [vmem:[%s182 + $0x1648] sm:$0xff]
        %v914 = vld [vmem:[%s182 + $0x1650] sm:$0xff]
        %v915 = vld [vmem:[%s182 + $0x1658] sm:$0xff]
        %v916 = vld [vmem:[%s182 + $0x1660] sm:$0xff]
        %v917 = vld [vmem:[%s182 + $0x1668] sm:$0xff]
        %v918 = vld [vmem:[%s182 + $0x1670] sm:$0xff]
        %v919 = vld [vmem:[%s182 + $0x1678] sm:$0xff]
        %v920 = vld [vmem:[%s182 + $0x1680] sm:$0xff]
        %v921 = vld [vmem:[%s182 + $0x1688] sm:$0xff]
        %v922 = vld [vmem:[%s182 + $0x1690] sm:$0xff]
        %v923 = vld [vmem:[%s182 + $0x1698] sm:$0xff]
        %v924 = vld [vmem:[%s182 + $0x16a0] sm:$0xff]
        %v925 = vld [vmem:[%s182 + $0x16a8] sm:$0xff]
        %v926 = vld [vmem:[%s182 + $0x16b0] sm:$0xff]
        %v927 = vld [vmem:[%s182 + $0x16b8] sm:$0xff]
        %v928 = vld [vmem:[%s182 + $0x16c0] sm:$0xff]
        %v929 = vld [vmem:[%s182 + $0x16c8] sm:$0xff]
        %v930 = vld [vmem:[%s182 + $0x16d0] sm:$0xff]
        %v931 = vld [vmem:[%s182 + $0x16d8] sm:$0xff]
        %v932 = vld [vmem:[%s182 + $0x16e0] sm:$0xff]
        %v933 = vld [vmem:[%s182 + $0x16e8] sm:$0xff]
        %v934 = vld [vmem:[%s182 + $0x16f0] sm:$0xff]
        %v935 = vld [vmem:[%s182 + $0x16f8] sm:$0xff]
        %v936 = vld [vmem:[%s182 + $0x1700] sm:$0xff]
        %v937 = vld [vmem:[%s182 + $0x1708] sm:$0xff]
        %v938 = vld [vmem:[%s182 + $0x1710] sm:$0xff]
        %v939 = vld [vmem:[%s182 + $0x1718] sm:$0xff]
        %v940 = vld [vmem:[%s182 + $0x1720] sm:$0xff]
        %v941 = vld [vmem:[%s182 + $0x1728] sm:$0xff]
        %v942 = vld [vmem:[%s182 + $0x1730] sm:$0xff]
        %v943 = vld [vmem:[%s182 + $0x1738] sm:$0xff]
        %v944 = vld [vmem:[%s182 + $0x1740] sm:$0xff]
        %v945 = vld [vmem:[%s182 + $0x1748] sm:$0xff]
        %v946 = vld [vmem:[%s182 + $0x1750] sm:$0xff]
        %v947 = vld [vmem:[%s182 + $0x1758] sm:$0xff]
        %v948 = vld [vmem:[%s182 + $0x1760] sm:$0xff]
        %v949 = vld [vmem:[%s182 + $0x1768] sm:$0xff]
        %v950 = vld [vmem:[%s182 + $0x1770] sm:$0xff]
        %v951 = vld [vmem:[%s182 + $0x1778] sm:$0xff]
        %v952 = vld [vmem:[%s182 + $0x1780] sm:$0xff]
        %v953 = vld [vmem:[%s182 + $0x1788] sm:$0xff]
        %v954 = vld [vmem:[%s182 + $0x1790] sm:$0xff]
        %v955 = vld [vmem:[%s182 + $0x1798] sm:$0xff]
        %v956 = vld [vmem:[%s182 + $0x17a0] sm:$0xff]
        %v957 = vld [vmem:[%s182 + $0x17a8] sm:$0xff]
        %v958 = vld [vmem:[%s182 + $0x17b0] sm:$0xff]
        %v959 = vld [vmem:[%s182 + $0x17b8] sm:$0xff]
        %v960 = vld [vmem:[%s182 + $0x17c0] sm:$0xff]
        %v961 = vld [vmem:[%s182 + $0x17c8] sm:$0xff]
        %v962 = vld [vmem:[%s182 + $0x17d0] sm:$0xff]
        %v963 = vld [vmem:[%s182 + $0x17d8] sm:$0xff]
        %v964 = vld [vmem:[%s182 + $0x17e0] sm:$0xff]
        %v965 = vld [vmem:[%s182 + $0x17e8] sm:$0xff]
        %v966 = vld [vmem:[%s182 + $0x17f0] sm:$0xff]
        %v967 = vld [vmem:[%s182 + $0x17f8] sm:$0xff]
        %968 = vmatprep.subr.mxu0 %v201
        %969 = vmatpush1.msra.mxu0 %v200
        %970 = vmatprep.subr.mxu0 %v204
        %971 = vmatpush1.msra.mxu0 %v203
        %972 = vmatprep.subr.mxu0 %v207
        %973 = vmatpush1.msra.mxu0 %v206
        %974 = vmatprep.subr.mxu0 %v210
        %975 = vmatpush1.msra.mxu0 %v209
        %976 = vmatprep.subr.mxu0 %v213
        %977 = vmatpush1.msra.mxu0 %v212
        %978 = vmatprep.subr.mxu0 %v216
        %979 = vmatpush1.msra.mxu0 %v215
        %980 = vmatprep.subr.mxu0 %v219
        %981 = vmatpush1.msra.mxu0 %v218
        %982 = vmatprep.subr.mxu0 %v222
        %983 = vmatpush1.msra.mxu0 %v221
        %984 = vmatprep.subr.mxu0 %v225
        %985 = vmatpush1.msra.mxu0 %v224
        %986 = vmatprep.subr.mxu0 %v228
        %987 = vmatpush1.msra.mxu0 %v227
        %988 = vmatprep.subr.mxu0 %v231
        %989 = vmatpush1.msra.mxu0 %v230
        %990 = vmatprep.subr.mxu0 %v234
        %991 = vmatpush1.msra.mxu0 %v233
        %992 = vmatprep.subr.mxu0 %v237
        %993 = vmatpush1.msra.mxu0 %v236
        %994 = vmatprep.subr.mxu0 %v240
        %995 = vmatpush1.msra.mxu0 %v239
        %996 = vmatprep.subr.mxu0 %v243
        %997 = vmatpush1.msra.mxu0 %v242
        %998 = vmatprep.subr.mxu0 %v246
        %999 = vmatpush1.msra.mxu0 %v245
        %1000 = vmatprep.subr.mxu0 %v249
        %1001 = vmatpush1.msra.mxu0 %v248
        %1002 = vmatprep.subr.mxu0 %v252
        %1003 = vmatpush1.msra.mxu0 %v251
        %1004 = vmatprep.subr.mxu0 %v255
        %1005 = vmatpush1.msra.mxu0 %v254
        %1006 = vmatprep.subr.mxu0 %v258
        %1007 = vmatpush1.msra.mxu0 %v257
        %1008 = vmatprep.subr.mxu0 %v261
        %1009 = vmatpush1.msra.mxu0 %v260
        %1010 = vmatprep.subr.mxu0 %v264
        %1011 = vmatpush1.msra.mxu0 %v263
        %1012 = vmatprep.subr.mxu0 %v267
        %1013 = vmatpush1.msra.mxu0 %v266
        %1014 = vmatprep.subr.mxu0 %v270
        %1015 = vmatpush1.msra.mxu0 %v269
        %1016 = vmatprep.subr.mxu0 %v273
        %1017 = vmatpush1.msra.mxu0 %v272
        %1018 = vmatprep.subr.mxu0 %v276
        %1019 = vmatpush1.msra.mxu0 %v275
        %1020 = vmatprep.subr.mxu0 %v279
        %1021 = vmatpush1.msra.mxu0 %v278
        %1022 = vmatprep.subr.mxu0 %v282
        %1023 = vmatpush1.msra.mxu0 %v281
        %1024 = vmatprep.subr.mxu0 %v285
        %1025 = vmatpush1.msra.mxu0 %v284
        %1026 = vmatprep.subr.mxu0 %v288
        %1027 = vmatpush1.msra.mxu0 %v287
        %1028 = vmatprep.subr.mxu0 %v291
        %1029 = vmatpush1.msra.mxu0 %v290
        %1030 = vmatprep.subr.mxu0 %v294
        %1031 = vmatpush1.msra.mxu0 %v293
        %1032 = vmatprep.mubr.f32.mxu0 %v185
        %1033 = vmatmul.mubr.f32.gmra.mrb[0].mxu0 %v184
        %v1034 = vpop.f32.mrb[0].mxu0
        %v1035 = vadd.f32 0.0, %v1034
        %v1036 = vpop.f32.mrb[0].mxu0
        %v1037 = vadd.f32 0.0, %v1036
        %1038 = vdwg.mxu0
        %1039 = vmatprep.subr.mxu0 %v297
        %1040 = vmatpush1.msra.mxu0 %v296
        %1041 = vmatprep.subr.mxu0 %v300
        %1042 = vmatpush1.msra.mxu0 %v299
        %1043 = vmatprep.subr.mxu0 %v303
        %1044 = vmatpush1.msra.mxu0 %v302
        %1045 = vmatprep.subr.mxu0 %v306
        %1046 = vmatpush1.msra.mxu0 %v305
        %1047 = vmatprep.subr.mxu0 %v309
        %1048 = vmatpush1.msra.mxu0 %v308
        %1049 = vmatprep.subr.mxu0 %v312
        %1050 = vmatpush1.msra.mxu0 %v311
        %1051 = vmatprep.subr.mxu0 %v315
        %1052 = vmatpush1.msra.mxu0 %v314
        %1053 = vmatprep.subr.mxu0 %v318
        %1054 = vmatpush1.msra.mxu0 %v317
        %1055 = vmatprep.subr.mxu0 %v321
        %1056 = vmatpush1.msra.mxu0 %v320
        %1057 = vmatprep.subr.mxu0 %v324
        %1058 = vmatpush1.msra.mxu0 %v323
        %1059 = vmatprep.subr.mxu0 %v327
        %1060 = vmatpush1.msra.mxu0 %v326
        %1061 = vmatprep.subr.mxu0 %v330
        %1062 = vmatpush1.msra.mxu0 %v329
        %1063 = vmatprep.subr.mxu0 %v333
        %1064 = vmatpush1.msra.mxu0 %v332
        %1065 = vmatprep.subr.mxu0 %v336
        %1066 = vmatpush1.msra.mxu0 %v335
        %1067 = vmatprep.subr.mxu0 %v339
        %1068 = vmatpush1.msra.mxu0 %v338
        %1069 = vmatprep.subr.mxu0 %v342
        %1070 = vmatpush1.msra.mxu0 %v341
        %1071 = vmatprep.subr.mxu0 %v345
        %1072 = vmatpush1.msra.mxu0 %v344
        %1073 = vmatprep.subr.mxu0 %v348
        %1074 = vmatpush1.msra.mxu0 %v347
        %1075 = vmatprep.subr.mxu0 %v351
        %1076 = vmatpush1.msra.mxu0 %v350
        %1077 = vmatprep.subr.mxu0 %v354
        %1078 = vmatpush1.msra.mxu0 %v353
        %1079 = vmatprep.subr.mxu0 %v357
        %1080 = vmatpush1.msra.mxu0 %v356
        %1081 = vmatprep.subr.mxu0 %v360
        %1082 = vmatpush1.msra.mxu0 %v359
        %1083 = vmatprep.subr.mxu0 %v363
        %1084 = vmatpush1.msra.mxu0 %v362
        %1085 = vmatprep.subr.mxu0 %v366
        %1086 = vmatpush1.msra.mxu0 %v365
        %1087 = vmatprep.subr.mxu0 %v369
        %1088 = vmatpush1.msra.mxu0 %v368
        %1089 = vmatprep.subr.mxu0 %v372
        %1090 = vmatpush1.msra.mxu0 %v371
        %1091 = vmatprep.subr.mxu0 %v375
        %1092 = vmatpush1.msra.mxu0 %v374
        %1093 = vmatprep.subr.mxu0 %v378
        %1094 = vmatpush1.msra.mxu0 %v377
        %1095 = vmatprep.subr.mxu0 %v381
        %1096 = vmatpush1.msra.mxu0 %v380
        %1097 = vmatprep.subr.mxu0 %v384
        %1098 = vmatpush1.msra.mxu0 %v383
        %1099 = vmatprep.subr.mxu0 %v387
        %1100 = vmatpush1.msra.mxu0 %v386
        %1101 = vmatprep.subr.mxu0 %v390
        %1102 = vmatpush1.msra.mxu0 %v389
        %1103 = vmatprep.mubr.f32.mxu0 %v187
        %1104 = vmatmul.mubr.f32.gmra.mrb[0].mxu0 %v186
        %v1105 = vpop.f32.mrb[0].mxu0
        %v1106 = vadd.f32 %v1035, %v1105
        %v1107 = vpop.f32.mrb[0].mxu0
        %v1108 = vadd.f32 %v1037, %v1107
        %1109 = vdwg.mxu0
        %1110 = vmatprep.subr.mxu0 %v393
        %1111 = vmatpush1.msra.mxu0 %v392
        %1112 = vmatprep.subr.mxu0 %v396
        %1113 = vmatpush1.msra.mxu0 %v395
        %1114 = vmatprep.subr.mxu0 %v399
        %1115 = vmatpush1.msra.mxu0 %v398
        %1116 = vmatprep.subr.mxu0 %v402
        %1117 = vmatpush1.msra.mxu0 %v401
        %1118 = vmatprep.subr.mxu0 %v405
        %1119 = vmatpush1.msra.mxu0 %v404
        %1120 = vmatprep.subr.mxu0 %v408
        %1121 = vmatpush1.msra.mxu0 %v407
        %1122 = vmatprep.subr.mxu0 %v411
        %1123 = vmatpush1.msra.mxu0 %v410
        %1124 = vmatprep.subr.mxu0 %v414
        %1125 = vmatpush1.msra.mxu0 %v413
        %1126 = vmatprep.subr.mxu0 %v417
        %1127 = vmatpush1.msra.mxu0 %v416
        %1128 = vmatprep.subr.mxu0 %v420
        %1129 = vmatpush1.msra.mxu0 %v419
        %1130 = vmatprep.subr.mxu0 %v423
        %1131 = vmatpush1.msra.mxu0 %v422
        %1132 = vmatprep.subr.mxu0 %v426
        %1133 = vmatpush1.msra.mxu0 %v425
        %1134 = vmatprep.subr.mxu0 %v429
        %1135 = vmatpush1.msra.mxu0 %v428
        %1136 = vmatprep.subr.mxu0 %v432
        %1137 = vmatpush1.msra.mxu0 %v431
        %1138 = vmatprep.subr.mxu0 %v435
        %1139 = vmatpush1.msra.mxu0 %v434
        %1140 = vmatprep.subr.mxu0 %v438
        %1141 = vmatpush1.msra.mxu0 %v437
        %1142 = vmatprep.subr.mxu0 %v441
        %1143 = vmatpush1.msra.mxu0 %v440
        %1144 = vmatprep.subr.mxu0 %v444
        %1145 = vmatpush1.msra.mxu0 %v443
        %1146 = vmatprep.subr.mxu0 %v447
        %1147 = vmatpush1.msra.mxu0 %v446
        %1148 = vmatprep.subr.mxu0 %v450
        %1149 = vmatpush1.msra.mxu0 %v449
        %1150 = vmatprep.subr.mxu0 %v453
        %1151 = vmatpush1.msra.mxu0 %v452
        %1152 = vmatprep.subr.mxu0 %v456
        %1153 = vmatpush1.msra.mxu0 %v455
        %1154 = vmatprep.subr.mxu0 %v459
        %1155 = vmatpush1.msra.mxu0 %v458
        %1156 = vmatprep.subr.mxu0 %v462
        %1157 = vmatpush1.msra.mxu0 %v461
        %1158 = vmatprep.subr.mxu0 %v465
        %1159 = vmatpush1.msra.mxu0 %v464
        %1160 = vmatprep.subr.mxu0 %v468
        %1161 = vmatpush1.msra.mxu0 %v467
        %1162 = vmatprep.subr.mxu0 %v471
        %1163 = vmatpush1.msra.mxu0 %v470
        %1164 = vmatprep.subr.mxu0 %v474
        %1165 = vmatpush1.msra.mxu0 %v473
        %1166 = vmatprep.subr.mxu0 %v477
        %1167 = vmatpush1.msra.mxu0 %v476
        %1168 = vmatprep.subr.mxu0 %v480
        %1169 = vmatpush1.msra.mxu0 %v479
        %1170 = vmatprep.subr.mxu0 %v483
        %1171 = vmatpush1.msra.mxu0 %v482
        %1172 = vmatprep.subr.mxu0 %v486
        %1173 = vmatpush1.msra.mxu0 %v485
        %1174 = vmatprep.mubr.f32.mxu0 %v189
        %1175 = vmatmul.mubr.f32.gmra.mrb[0].mxu0 %v188
        %v1176 = vpop.f32.mrb[0].mxu0
        %v1177 = vadd.f32 %v1106, %v1176
        %v1178 = vpop.f32.mrb[0].mxu0
        %v1179 = vadd.f32 %v1108, %v1178
        %1180 = vdwg.mxu0
        %1181 = vmatprep.subr.mxu0 %v489
        %1182 = vmatpush1.msra.mxu0 %v488
        %1183 = vmatprep.subr.mxu0 %v492
        %1184 = vmatpush1.msra.mxu0 %v491
        %1185 = vmatprep.subr.mxu0 %v495
        %1186 = vmatpush1.msra.mxu0 %v494
        %1187 = vmatprep.subr.mxu0 %v498
        %1188 = vmatpush1.msra.mxu0 %v497
        %1189 = vmatprep.subr.mxu0 %v501
        %1190 = vmatpush1.msra.mxu0 %v500
        %1191 = vmatprep.subr.mxu0 %v504
        %1192 = vmatpush1.msra.mxu0 %v503
        %1193 = vmatprep.subr.mxu0 %v507
        %1194 = vmatpush1.msra.mxu0 %v506
        %1195 = vmatprep.subr.mxu0 %v510
        %1196 = vmatpush1.msra.mxu0 %v509
        %1197 = vmatprep.subr.mxu0 %v513
        %1198 = vmatpush1.msra.mxu0 %v512
        %1199 = vmatprep.subr.mxu0 %v516
        %1200 = vmatpush1.msra.mxu0 %v515
        %1201 = vmatprep.subr.mxu0 %v519
        %1202 = vmatpush1.msra.mxu0 %v518
        %1203 = vmatprep.subr.mxu0 %v522
        %1204 = vmatpush1.msra.mxu0 %v521
        %1205 = vmatprep.subr.mxu0 %v525
        %1206 = vmatpush1.msra.mxu0 %v524
        %1207 = vmatprep.subr.mxu0 %v528
        %1208 = vmatpush1.msra.mxu0 %v527
        %1209 = vmatprep.subr.mxu0 %v531
        %1210 = vmatpush1.msra.mxu0 %v530
        %1211 = vmatprep.subr.mxu0 %v534
        %1212 = vmatpush1.msra.mxu0 %v533
        %1213 = vmatprep.subr.mxu0 %v537
        %1214 = vmatpush1.msra.mxu0 %v536
        %1215 = vmatprep.subr.mxu0 %v540
        %1216 = vmatpush1.msra.mxu0 %v539
        %1217 = vmatprep.subr.mxu0 %v543
        %1218 = vmatpush1.msra.mxu0 %v542
        %1219 = vmatprep.subr.mxu0 %v546
        %1220 = vmatpush1.msra.mxu0 %v545
        %1221 = vmatprep.subr.mxu0 %v549
        %1222 = vmatpush1.msra.mxu0 %v548
        %1223 = vmatprep.subr.mxu0 %v552
        %1224 = vmatpush1.msra.mxu0 %v551
        %1225 = vmatprep.subr.mxu0 %v555
        %1226 = vmatpush1.msra.mxu0 %v554
        %1227 = vmatprep.subr.mxu0 %v558
        %1228 = vmatpush1.msra.mxu0 %v557
        %1229 = vmatprep.subr.mxu0 %v561
        %1230 = vmatpush1.msra.mxu0 %v560
        %1231 = vmatprep.subr.mxu0 %v564
        %1232 = vmatpush1.msra.mxu0 %v563
        %1233 = vmatprep.subr.mxu0 %v567
        %1234 = vmatpush1.msra.mxu0 %v566
        %1235 = vmatprep.subr.mxu0 %v570
        %1236 = vmatpush1.msra.mxu0 %v569
        %1237 = vmatprep.subr.mxu0 %v573
        %1238 = vmatpush1.msra.mxu0 %v572
        %1239 = vmatprep.subr.mxu0 %v576
        %1240 = vmatpush1.msra.mxu0 %v575
        %1241 = vmatprep.subr.mxu0 %v579
        %1242 = vmatpush1.msra.mxu0 %v578
        %1243 = vmatprep.subr.mxu0 %v582
        %1244 = vmatpush1.msra.mxu0 %v581
        %1245 = vmatprep.mubr.f32.mxu0 %v191
        %1246 = vmatmul.mubr.f32.gmra.mrb[0].mxu0 %v190
        %v1247 = vpop.f32.mrb[0].mxu0
        %v1248 = vadd.f32 %v1177, %v1247
        %v1249 = vpop.f32.mrb[0].mxu0
        %v1250 = vadd.f32 %v1179, %v1249
        %1251 = vdwg.mxu0
        %1252 = vmatprep.subr.mxu0 %v585
        %1253 = vmatpush1.msra.mxu0 %v584
        %1254 = vmatprep.subr.mxu0 %v588
        %1255 = vmatpush1.msra.mxu0 %v587
        %1256 = vmatprep.subr.mxu0 %v591
        %1257 = vmatpush1.msra.mxu0 %v590
        %1258 = vmatprep.subr.mxu0 %v594
        %1259 = vmatpush1.msra.mxu0 %v593
        %1260 = vmatprep.subr.mxu0 %v597
        %1261 = vmatpush1.msra.mxu0 %v596
        %1262 = vmatprep.subr.mxu0 %v600
        %1263 = vmatpush1.msra.mxu0 %v599
        %1264 = vmatprep.subr.mxu0 %v603
        %1265 = vmatpush1.msra.mxu0 %v602
        %1266 = vmatprep.subr.mxu0 %v606
        %1267 = vmatpush1.msra.mxu0 %v605
        %1268 = vmatprep.subr.mxu0 %v609
        %1269 = vmatpush1.msra.mxu0 %v608
        %1270 = vmatprep.subr.mxu0 %v612
        %1271 = vmatpush1.msra.mxu0 %v611
        %1272 = vmatprep.subr.mxu0 %v615
        %1273 = vmatpush1.msra.mxu0 %v614
        %1274 = vmatprep.subr.mxu0 %v618
        %1275 = vmatpush1.msra.mxu0 %v617
        %1276 = vmatprep.subr.mxu0 %v621
        %1277 = vmatpush1.msra.mxu0 %v620
        %1278 = vmatprep.subr.mxu0 %v624
        %1279 = vmatpush1.msra.mxu0 %v623
        %1280 = vmatprep.subr.mxu0 %v627
        %1281 = vmatpush1.msra.mxu0 %v626
        %1282 = vmatprep.subr.mxu0 %v630
        %1283 = vmatpush1.msra.mxu0 %v629
        %1284 = vmatprep.subr.mxu0 %v633
        %1285 = vmatpush1.msra.mxu0 %v632
        %1286 = vmatprep.subr.mxu0 %v636
        %1287 = vmatpush1.msra.mxu0 %v635
        %1288 = vmatprep.subr.mxu0 %v639
        %1289 = vmatpush1.msra.mxu0 %v638
        %1290 = vmatprep.subr.mxu0 %v642
        %1291 = vmatpush1.msra.mxu0 %v641
        %1292 = vmatprep.subr.mxu0 %v645
        %1293 = vmatpush1.msra.mxu0 %v644
        %1294 = vmatprep.subr.mxu0 %v648
        %1295 = vmatpush1.msra.mxu0 %v647
        %1296 = vmatprep.subr.mxu0 %v651
        %1297 = vmatpush1.msra.mxu0 %v650
        %1298 = vmatprep.subr.mxu0 %v654
        %1299 = vmatpush1.msra.mxu0 %v653
        %1300 = vmatprep.subr.mxu0 %v657
        %1301 = vmatpush1.msra.mxu0 %v656
        %1302 = vmatprep.subr.mxu0 %v660
        %1303 = vmatpush1.msra.mxu0 %v659
        %1304 = vmatprep.subr.mxu0 %v663
        %1305 = vmatpush1.msra.mxu0 %v662
        %1306 = vmatprep.subr.mxu0 %v666
        %1307 = vmatpush1.msra.mxu0 %v665
        %1308 = vmatprep.subr.mxu0 %v669
        %1309 = vmatpush1.msra.mxu0 %v668
        %1310 = vmatprep.subr.mxu0 %v672
        %1311 = vmatpush1.msra.mxu0 %v671
        %1312 = vmatprep.subr.mxu0 %v675
        %1313 = vmatpush1.msra.mxu0 %v674
        %1314 = vmatprep.subr.mxu0 %v678
        %1315 = vmatpush1.msra.mxu0 %v677
        %1316 = vmatprep.mubr.f32.mxu0 %v193
        %1317 = vmatmul.mubr.f32.gmra.mrb[0].mxu0 %v192
        %v1318 = vpop.f32.mrb[0].mxu0
        %v1319 = vadd.f32 %v1248, %v1318
        %v1320 = vpop.f32.mrb[0].mxu0
        %v1321 = vadd.f32 %v1250, %v1320
        %1322 = vdwg.mxu0
        %1323 = vmatprep.subr.mxu0 %v681
        %1324 = vmatpush1.msra.mxu0 %v680
        %1325 = vmatprep.subr.mxu0 %v684
        %1326 = vmatpush1.msra.mxu0 %v683
        %1327 = vmatprep.subr.mxu0 %v687
        %1328 = vmatpush1.msra.mxu0 %v686
        %1329 = vmatprep.subr.mxu0 %v690
        %1330 = vmatpush1.msra.mxu0 %v689
        %1331 = vmatprep.subr.mxu0 %v693
        %1332 = vmatpush1.msra.mxu0 %v692
        %1333 = vmatprep.subr.mxu0 %v696
        %1334 = vmatpush1.msra.mxu0 %v695
        %1335 = vmatprep.subr.mxu0 %v699
        %1336 = vmatpush1.msra.mxu0 %v698
        %1337 = vmatprep.subr.mxu0 %v702
        %1338 = vmatpush1.msra.mxu0 %v701
        %1339 = vmatprep.subr.mxu0 %v705
        %1340 = vmatpush1.msra.mxu0 %v704
        %1341 = vmatprep.subr.mxu0 %v708
        %1342 = vmatpush1.msra.mxu0 %v707
        %1343 = vmatprep.subr.mxu0 %v711
        %1344 = vmatpush1.msra.mxu0 %v710
        %1345 = vmatprep.subr.mxu0 %v714
        %1346 = vmatpush1.msra.mxu0 %v713
        %1347 = vmatprep.subr.mxu0 %v717
        %1348 = vmatpush1.msra.mxu0 %v716
        %1349 = vmatprep.subr.mxu0 %v720
        %1350 = vmatpush1.msra.mxu0 %v719
        %1351 = vmatprep.subr.mxu0 %v723
        %1352 = vmatpush1.msra.mxu0 %v722
        %1353 = vmatprep.subr.mxu0 %v726
        %1354 = vmatpush1.msra.mxu0 %v725
        %1355 = vmatprep.subr.mxu0 %v729
        %1356 = vmatpush1.msra.mxu0 %v728
        %1357 = vmatprep.subr.mxu0 %v732
        %1358 = vmatpush1.msra.mxu0 %v731
        %1359 = vmatprep.subr.mxu0 %v735
        %1360 = vmatpush1.msra.mxu0 %v734
        %1361 = vmatprep.subr.mxu0 %v738
        %1362 = vmatpush1.msra.mxu0 %v737
        %1363 = vmatprep.subr.mxu0 %v741
        %1364 = vmatpush1.msra.mxu0 %v740
        %1365 = vmatprep.subr.mxu0 %v744
        %1366 = vmatpush1.msra.mxu0 %v743
        %1367 = vmatprep.subr.mxu0 %v747
        %1368 = vmatpush1.msra.mxu0 %v746
        %1369 = vmatprep.subr.mxu0 %v750
        %1370 = vmatpush1.msra.mxu0 %v749
        %1371 = vmatprep.subr.mxu0 %v753
        %1372 = vmatpush1.msra.mxu0 %v752
        %1373 = vmatprep.subr.mxu0 %v756
        %1374 = vmatpush1.msra.mxu0 %v755
        %1375 = vmatprep.subr.mxu0 %v759
        %1376 = vmatpush1.msra.mxu0 %v758
        %1377 = vmatprep.subr.mxu0 %v762
        %1378 = vmatpush1.msra.mxu0 %v761
        %1379 = vmatprep.subr.mxu0 %v765
        %1380 = vmatpush1.msra.mxu0 %v764
        %1381 = vmatprep.subr.mxu0 %v768
        %1382 = vmatpush1.msra.mxu0 %v767
        %1383 = vmatprep.subr.mxu0 %v771
        %1384 = vmatpush1.msra.mxu0 %v770
        %1385 = vmatprep.subr.mxu0 %v774
        %1386 = vmatpush1.msra.mxu0 %v773
        %1387 = vmatprep.mubr.f32.mxu0 %v195
        %1388 = vmatmul.mubr.f32.gmra.mrb[0].mxu0 %v194
        %v1389 = vpop.f32.mrb[0].mxu0
        %v1390 = vadd.f32 %v1319, %v1389
        %v1391 = vpop.f32.mrb[0].mxu0
        %v1392 = vadd.f32 %v1321, %v1391
        %1393 = vdwg.mxu0
        %1394 = vmatprep.subr.mxu0 %v777
        %1395 = vmatpush1.msra.mxu0 %v776
        %1396 = vmatprep.subr.mxu0 %v780
        %1397 = vmatpush1.msra.mxu0 %v779
        %1398 = vmatprep.subr.mxu0 %v783
        %1399 = vmatpush1.msra.mxu0 %v782
        %1400 = vmatprep.subr.mxu0 %v786
        %1401 = vmatpush1.msra.mxu0 %v785
        %1402 = vmatprep.subr.mxu0 %v789
        %1403 = vmatpush1.msra.mxu0 %v788
        %1404 = vmatprep.subr.mxu0 %v792
        %1405 = vmatpush1.msra.mxu0 %v791
        %1406 = vmatprep.subr.mxu0 %v795
        %1407 = vmatpush1.msra.mxu0 %v794
        %1408 = vmatprep.subr.mxu0 %v798
        %1409 = vmatpush1.msra.mxu0 %v797
        %1410 = vmatprep.subr.mxu0 %v801
        %1411 = vmatpush1.msra.mxu0 %v800
        %1412 = vmatprep.subr.mxu0 %v804
        %1413 = vmatpush1.msra.mxu0 %v803
        %1414 = vmatprep.subr.mxu0 %v807
        %1415 = vmatpush1.msra.mxu0 %v806
        %1416 = vmatprep.subr.mxu0 %v810
        %1417 = vmatpush1.msra.mxu0 %v809
        %1418 = vmatprep.subr.mxu0 %v813
        %1419 = vmatpush1.msra.mxu0 %v812
        %1420 = vmatprep.subr.mxu0 %v816
        %1421 = vmatpush1.msra.mxu0 %v815
        %1422 = vmatprep.subr.mxu0 %v819
        %1423 = vmatpush1.msra.mxu0 %v818
        %1424 = vmatprep.subr.mxu0 %v822
        %1425 = vmatpush1.msra.mxu0 %v821
        %1426 = vmatprep.subr.mxu0 %v825
        %1427 = vmatpush1.msra.mxu0 %v824
        %1428 = vmatprep.subr.mxu0 %v828
        %1429 = vmatpush1.msra.mxu0 %v827
        %1430 = vmatprep.subr.mxu0 %v831
        %1431 = vmatpush1.msra.mxu0 %v830
        %1432 = vmatprep.subr.mxu0 %v834
        %1433 = vmatpush1.msra.mxu0 %v833
        %1434 = vmatprep.subr.mxu0 %v837
        %1435 = vmatpush1.msra.mxu0 %v836
        %1436 = vmatprep.subr.mxu0 %v840
        %1437 = vmatpush1.msra.mxu0 %v839
        %1438 = vmatprep.subr.mxu0 %v843
        %1439 = vmatpush1.msra.mxu0 %v842
        %1440 = vmatprep.subr.mxu0 %v846
        %1441 = vmatpush1.msra.mxu0 %v845
        %1442 = vmatprep.subr.mxu0 %v849
        %1443 = vmatpush1.msra.mxu0 %v848
        %1444 = vmatprep.subr.mxu0 %v852
        %1445 = vmatpush1.msra.mxu0 %v851
        %1446 = vmatprep.subr.mxu0 %v855
        %1447 = vmatpush1.msra.mxu0 %v854
        %1448 = vmatprep.subr.mxu0 %v858
        %1449 = vmatpush1.msra.mxu0 %v857
        %1450 = vmatprep.subr.mxu0 %v861
        %1451 = vmatpush1.msra.mxu0 %v860
        %1452 = vmatprep.subr.mxu0 %v864
        %1453 = vmatpush1.msra.mxu0 %v863
        %1454 = vmatprep.subr.mxu0 %v867
        %1455 = vmatpush1.msra.mxu0 %v866
        %1456 = vmatprep.subr.mxu0 %v870
        %1457 = vmatpush1.msra.mxu0 %v869
        %1458 = vmatprep.mubr.f32.mxu0 %v197
        %1459 = vmatmul.mubr.f32.gmra.mrb[0].mxu0 %v196
        %v1460 = vpop.f32.mrb[0].mxu0
        %v1461 = vadd.f32 %v1390, %v1460
        %v1462 = vpop.f32.mrb[0].mxu0
        %v1463 = vadd.f32 %v1392, %v1462
        %1464 = vdwg.mxu0
        %1465 = vmatprep.subr.mxu0 %v873
        %1466 = vmatpush1.msra.mxu0 %v872
        %1467 = vmatprep.subr.mxu0 %v876
        %1468 = vmatpush1.msra.mxu0 %v875
        %1469 = vmatprep.subr.mxu0 %v879
        %1470 = vmatpush1.msra.mxu0 %v878
        %1471 = vmatprep.subr.mxu0 %v882
        %1472 = vmatpush1.msra.mxu0 %v881
        %1473 = vmatprep.subr.mxu0 %v885
        %1474 = vmatpush1.msra.mxu0 %v884
        %1475 = vmatprep.subr.mxu0 %v888
        %1476 = vmatpush1.msra.mxu0 %v887
        %1477 = vmatprep.subr.mxu0 %v891
        %1478 = vmatpush1.msra.mxu0 %v890
        %1479 = vmatprep.subr.mxu0 %v894
        %1480 = vmatpush1.msra.mxu0 %v893
        %1481 = vmatprep.subr.mxu0 %v897
        %1482 = vmatpush1.msra.mxu0 %v896
        %1483 = vmatprep.subr.mxu0 %v900
        %1484 = vmatpush1.msra.mxu0 %v899
        %1485 = vmatprep.subr.mxu0 %v903
        %1486 = vmatpush1.msra.mxu0 %v902
        %1487 = vmatprep.subr.mxu0 %v906
        %1488 = vmatpush1.msra.mxu0 %v905
        %1489 = vmatprep.subr.mxu0 %v909
        %1490 = vmatpush1.msra.mxu0 %v908
        %1491 = vmatprep.subr.mxu0 %v912
        %1492 = vmatpush1.msra.mxu0 %v911
        %1493 = vmatprep.subr.mxu0 %v915
        %1494 = vmatpush1.msra.mxu0 %v914
        %1495 = vmatprep.subr.mxu0 %v918
        %1496 = vmatpush1.msra.mxu0 %v917
        %1497 = vmatprep.subr.mxu0 %v921
        %1498 = vmatpush1.msra.mxu0 %v920
        %1499 = vmatprep.subr.mxu0 %v924
        %1500 = vmatpush1.msra.mxu0 %v923
        %1501 = vmatprep.subr.mxu0 %v927
        %1502 = vmatpush1.msra.mxu0 %v926
        %1503 = vmatprep.subr.mxu0 %v930
        %1504 = vmatpush1.msra.mxu0 %v929
        %1505 = vmatprep.subr.mxu0 %v933
        %1506 = vmatpush1.msra.mxu0 %v932
        %1507 = vmatprep.subr.mxu0 %v936
        %1508 = vmatpush1.msra.mxu0 %v935
        %1509 = vmatprep.subr.mxu0 %v939
        %1510 = vmatpush1.msra.mxu0 %v938
        %1511 = vmatprep.subr.mxu0 %v942
        %1512 = vmatpush1.msra.mxu0 %v941
        %1513 = vmatprep.subr.mxu0 %v945
        %1514 = vmatpush1.msra.mxu0 %v944
        %1515 = vmatprep.subr.mxu0 %v948
        %1516 = vmatpush1.msra.mxu0 %v947
        %1517 = vmatprep.subr.mxu0 %v951
        %1518 = vmatpush1.msra.mxu0 %v950
        %1519 = vmatprep.subr.mxu0 %v954
        %1520 = vmatpush1.msra.mxu0 %v953
        %1521 = vmatprep.subr.mxu0 %v957
        %1522 = vmatpush1.msra.mxu0 %v956
        %1523 = vmatprep.subr.mxu0 %v960
        %1524 = vmatpush1.msra.mxu0 %v959
        %1525 = vmatprep.subr.mxu0 %v963
        %1526 = vmatpush1.msra.mxu0 %v962
        %1527 = vmatprep.subr.mxu0 %v966
        %1528 = vmatpush1.msra.mxu0 %v965
        %1529 = vmatprep.mubr.f32.mxu0 %v199
        %1530 = vmatmul.mubr.f32.gmra.mrb[0].mxu0 %v198
        %v1531 = vpop.f32.mrb[0].mxu0
        %v1532 = vadd.f32 %v1461, %v1531
        %v1533 = vpop.f32.mrb[0].mxu0
        %v1534 = vadd.f32 %v1463, %v1533
        %1535 = vdwg.mxu0
        %1536 = vmatprep.subr.mxu0 0.0
        %1537 = vmatpush1.msra.mxu0 %v202
        %1538 = vmatprep.subr.mxu0 0.0
        %1539 = vmatpush1.msra.mxu0 %v205
        %1540 = vmatprep.subr.mxu0 0.0
        %1541 = vmatpush1.msra.mxu0 %v208
        %1542 = vmatprep.subr.mxu0 0.0
        %1543 = vmatpush1.msra.mxu0 %v211
        %1544 = vmatprep.subr.mxu0 0.0
        %1545 = vmatpush1.msra.mxu0 %v214
        %1546 = vmatprep.subr.mxu0 0.0
        %1547 = vmatpush1.msra.mxu0 %v217
        %1548 = vmatprep.subr.mxu0 0.0
        %1549 = vmatpush1.msra.mxu0 %v220
        %1550 = vmatprep.subr.mxu0 0.0
        %1551 = vmatpush1.msra.mxu0 %v223
        %1552 = vmatprep.subr.mxu0 0.0
        %1553 = vmatpush1.msra.mxu0 %v226
        %1554 = vmatprep.subr.mxu0 0.0
        %1555 = vmatpush1.msra.mxu0 %v229
        %1556 = vmatprep.subr.mxu0 0.0
        %1557 = vmatpush1.msra.mxu0 %v232
        %1558 = vmatprep.subr.mxu0 0.0
        %1559 = vmatpush1.msra.mxu0 %v235
        %1560 = vmatprep.subr.mxu0 0.0
        %1561 = vmatpush1.msra.mxu0 %v238
        %1562 = vmatprep.subr.mxu0 0.0
        %1563 = vmatpush1.msra.mxu0 %v241
        %1564 = vmatprep.subr.mxu0 0.0
        %1565 = vmatpush1.msra.mxu0 %v244
        %1566 = vmatprep.subr.mxu0 0.0
        %1567 = vmatpush1.msra.mxu0 %v247
        %1568 = vmatprep.subr.mxu0 0.0
        %1569 = vmatpush1.msra.mxu0 %v250
        %1570 = vmatprep.subr.mxu0 0.0
        %1571 = vmatpush1.msra.mxu0 %v253
        %1572 = vmatprep.subr.mxu0 0.0
        %1573 = vmatpush1.msra.mxu0 %v256
        %1574 = vmatprep.subr.mxu0 0.0
        %1575 = vmatpush1.msra.mxu0 %v259
        %1576 = vmatprep.subr.mxu0 0.0
        %1577 = vmatpush1.msra.mxu0 %v262
        %1578 = vmatprep.subr.mxu0 0.0
        %1579 = vmatpush1.msra.mxu0 %v265
        %1580 = vmatprep.subr.mxu0 0.0
        %1581 = vmatpush1.msra.mxu0 %v268
        %1582 = vmatprep.subr.mxu0 0.0
        %1583 = vmatpush1.msra.mxu0 %v271
        %1584 = vmatprep.subr.mxu0 0.0
        %1585 = vmatpush1.msra.mxu0 %v274
        %1586 = vmatprep.subr.mxu0 0.0
        %1587 = vmatpush1.msra.mxu0 %v277
        %1588 = vmatprep.subr.mxu0 0.0
        %1589 = vmatpush1.msra.mxu0 %v280
        %1590 = vmatprep.subr.mxu0 0.0
        %1591 = vmatpush1.msra.mxu0 %v283
        %1592 = vmatprep.subr.mxu0 0.0
        %1593 = vmatpush1.msra.mxu0 %v286
        %1594 = vmatprep.subr.mxu0 0.0
        %1595 = vmatpush1.msra.mxu0 %v289
        %1596 = vmatprep.subr.mxu0 0.0
        %1597 = vmatpush1.msra.mxu0 %v292
        %1598 = vmatprep.subr.mxu0 0.0
        %1599 = vmatpush1.msra.mxu0 %v295
        %1600 = vmatprep.mubr.f32.mxu0 %v185
        %1601 = vmatmul.mubr.f32.gmra.mrb[0].mxu0 %v184
        %v1602 = vpop.f32.mrb[0].mxu0
        %v1603 = vadd.f32 0.0, %v1602
        %v1604 = vpop.f32.mrb[0].mxu0
        %1605 = vdwg.mxu0
        %1606 = vmatprep.subr.mxu0 0.0
        %1607 = vmatpush1.msra.mxu0 %v298
        %1608 = vmatprep.subr.mxu0 0.0
        %1609 = vmatpush1.msra.mxu0 %v301
        %1610 = vmatprep.subr.mxu0 0.0
        %1611 = vmatpush1.msra.mxu0 %v304
        %1612 = vmatprep.subr.mxu0 0.0
        %1613 = vmatpush1.msra.mxu0 %v307
        %1614 = vmatprep.subr.mxu0 0.0
        %1615 = vmatpush1.msra.mxu0 %v310
        %1616 = vmatprep.subr.mxu0 0.0
        %1617 = vmatpush1.msra.mxu0 %v313
        %1618 = vmatprep.subr.mxu0 0.0
        %1619 = vmatpush1.msra.mxu0 %v316
        %1620 = vmatprep.subr.mxu0 0.0
        %1621 = vmatpush1.msra.mxu0 %v319
        %1622 = vmatprep.subr.mxu0 0.0
        %1623 = vmatpush1.msra.mxu0 %v322
        %1624 = vmatprep.subr.mxu0 0.0
        %1625 = vmatpush1.msra.mxu0 %v325
        %1626 = vmatprep.subr.mxu0 0.0
        %1627 = vmatpush1.msra.mxu0 %v328
        %1628 = vmatprep.subr.mxu0 0.0
        %1629 = vmatpush1.msra.mxu0 %v331
        %1630 = vmatprep.subr.mxu0 0.0
        %1631 = vmatpush1.msra.mxu0 %v334
        %1632 = vmatprep.subr.mxu0 0.0
        %1633 = vmatpush1.msra.mxu0 %v337
        %1634 = vmatprep.subr.mxu0 0.0
        %1635 = vmatpush1.msra.mxu0 %v340
        %1636 = vmatprep.subr.mxu0 0.0
        %1637 = vmatpush1.msra.mxu0 %v343
        %1638 = vmatprep.subr.mxu0 0.0
        %1639 = vmatpush1.msra.mxu0 %v346
        %1640 = vmatprep.subr.mxu0 0.0
        %1641 = vmatpush1.msra.mxu0 %v349
        %1642 = vmatprep.subr.mxu0 0.0
        %1643 = vmatpush1.msra.mxu0 %v352
        %1644 = vmatprep.subr.mxu0 0.0
        %1645 = vmatpush1.msra.mxu0 %v355
        %1646 = vmatprep.subr.mxu0 0.0
        %1647 = vmatpush1.msra.mxu0 %v358
        %1648 = vmatprep.subr.mxu0 0.0
        %1649 = vmatpush1.msra.mxu0 %v361
        %1650 = vmatprep.subr.mxu0 0.0
        %1651 = vmatpush1.msra.mxu0 %v364
        %1652 = vmatprep.subr.mxu0 0.0
        %1653 = vmatpush1.msra.mxu0 %v367
        %1654 = vmatprep.subr.mxu0 0.0
        %1655 = vmatpush1.msra.mxu0 %v370
        %1656 = vmatprep.subr.mxu0 0.0
        %1657 = vmatpush1.msra.mxu0 %v373
        %1658 = vmatprep.subr.mxu0 0.0
        %1659 = vmatpush1.msra.mxu0 %v376
        %1660 = vmatprep.subr.mxu0 0.0
        %1661 = vmatpush1.msra.mxu0 %v379
        %1662 = vmatprep.subr.mxu0 0.0
        %1663 = vmatpush1.msra.mxu0 %v382
        %1664 = vmatprep.subr.mxu0 0.0
        %1665 = vmatpush1.msra.mxu0 %v385
        %1666 = vmatprep.subr.mxu0 0.0
        %1667 = vmatpush1.msra.mxu0 %v388
        %1668 = vmatprep.subr.mxu0 0.0
        %1669 = vmatpush1.msra.mxu0 %v391
        %1670 = vmatprep.mubr.f32.mxu0 %v187
        %1671 = vmatmul.mubr.f32.gmra.mrb[0].mxu0 %v186
        %v1672 = vpop.f32.mrb[0].mxu0
        %v1673 = vadd.f32 %v1603, %v1672
        %v1674 = vpop.f32.mrb[0].mxu0
        %1675 = vdwg.mxu0
        %1676 = vmatprep.subr.mxu0 0.0
        %1677 = vmatpush1.msra.mxu0 %v394
        %1678 = vmatprep.subr.mxu0 0.0
        %1679 = vmatpush1.msra.mxu0 %v397
        %1680 = vmatprep.subr.mxu0 0.0
        %1681 = vmatpush1.msra.mxu0 %v400
        %1682 = vmatprep.subr.mxu0 0.0
        %1683 = vmatpush1.msra.mxu0 %v403
        %1684 = vmatprep.subr.mxu0 0.0
        %1685 = vmatpush1.msra.mxu0 %v406
        %1686 = vmatprep.subr.mxu0 0.0
        %1687 = vmatpush1.msra.mxu0 %v409
        %1688 = vmatprep.subr.mxu0 0.0
        %1689 = vmatpush1.msra.mxu0 %v412
        %1690 = vmatprep.subr.mxu0 0.0
        %1691 = vmatpush1.msra.mxu0 %v415
        %1692 = vmatprep.subr.mxu0 0.0
        %1693 = vmatpush1.msra.mxu0 %v418
        %1694 = vmatprep.subr.mxu0 0.0
        %1695 = vmatpush1.msra.mxu0 %v421
        %1696 = vmatprep.subr.mxu0 0.0
        %1697 = vmatpush1.msra.mxu0 %v424
        %1698 = vmatprep.subr.mxu0 0.0
        %1699 = vmatpush1.msra.mxu0 %v427
        %1700 = vmatprep.subr.mxu0 0.0
        %1701 = vmatpush1.msra.mxu0 %v430
        %1702 = vmatprep.subr.mxu0 0.0
        %1703 = vmatpush1.msra.mxu0 %v433
        %1704 = vmatprep.subr.mxu0 0.0
        %1705 = vmatpush1.msra.mxu0 %v436
        %1706 = vmatprep.subr.mxu0 0.0
        %1707 = vmatpush1.msra.mxu0 %v439
        %1708 = vmatprep.subr.mxu0 0.0
        %1709 = vmatpush1.msra.mxu0 %v442
        %1710 = vmatprep.subr.mxu0 0.0
        %1711 = vmatpush1.msra.mxu0 %v445
        %1712 = vmatprep.subr.mxu0 0.0
        %1713 = vmatpush1.msra.mxu0 %v448
        %1714 = vmatprep.subr.mxu0 0.0
        %1715 = vmatpush1.msra.mxu0 %v451
        %1716 = vmatprep.subr.mxu0 0.0
        %1717 = vmatpush1.msra.mxu0 %v454
        %1718 = vmatprep.subr.mxu0 0.0
        %1719 = vmatpush1.msra.mxu0 %v457
        %1720 = vmatprep.subr.mxu0 0.0
        %1721 = vmatpush1.msra.mxu0 %v460
        %1722 = vmatprep.subr.mxu0 0.0
        %1723 = vmatpush1.msra.mxu0 %v463
        %1724 = vmatprep.subr.mxu0 0.0
        %1725 = vmatpush1.msra.mxu0 %v466
        %1726 = vmatprep.subr.mxu0 0.0
        %1727 = vmatpush1.msra.mxu0 %v469
        %1728 = vmatprep.subr.mxu0 0.0
        %1729 = vmatpush1.msra.mxu0 %v472
        %1730 = vmatprep.subr.mxu0 0.0
        %1731 = vmatpush1.msra.mxu0 %v475
        %1732 = vmatprep.subr.mxu0 0.0
        %1733 = vmatpush1.msra.mxu0 %v478
        %1734 = vmatprep.subr.mxu0 0.0
        %1735 = vmatpush1.msra.mxu0 %v481
        %1736 = vmatprep.subr.mxu0 0.0
        %1737 = vmatpush1.msra.mxu0 %v484
        %1738 = vmatprep.subr.mxu0 0.0
        %1739 = vmatpush1.msra.mxu0 %v487
        %1740 = vmatprep.mubr.f32.mxu0 %v189
        %1741 = vmatmul.mubr.f32.gmra.mrb[0].mxu0 %v188
        %v1742 = vpop.f32.mrb[0].mxu0
        %v1743 = vadd.f32 %v1673, %v1742
        %v1744 = vpop.f32.mrb[0].mxu0
        %1745 = vdwg.mxu0
        %1746 = vmatprep.subr.mxu0 0.0
        %1747 = vmatpush1.msra.mxu0 %v490
        %1748 = vmatprep.subr.mxu0 0.0
        %1749 = vmatpush1.msra.mxu0 %v493
        %1750 = vmatprep.subr.mxu0 0.0
        %1751 = vmatpush1.msra.mxu0 %v496
        %1752 = vmatprep.subr.mxu0 0.0
        %1753 = vmatpush1.msra.mxu0 %v499
        %1754 = vmatprep.subr.mxu0 0.0
        %1755 = vmatpush1.msra.mxu0 %v502
        %1756 = vmatprep.subr.mxu0 0.0
        %1757 = vmatpush1.msra.mxu0 %v505
        %1758 = vmatprep.subr.mxu0 0.0
        %1759 = vmatpush1.msra.mxu0 %v508
        %1760 = vmatprep.subr.mxu0 0.0
        %1761 = vmatpush1.msra.mxu0 %v511
        %1762 = vmatprep.subr.mxu0 0.0
        %1763 = vmatpush1.msra.mxu0 %v514
        %1764 = vmatprep.subr.mxu0 0.0
        %1765 = vmatpush1.msra.mxu0 %v517
        %1766 = vmatprep.subr.mxu0 0.0
        %1767 = vmatpush1.msra.mxu0 %v520
        %1768 = vmatprep.subr.mxu0 0.0
        %1769 = vmatpush1.msra.mxu0 %v523
        %1770 = vmatprep.subr.mxu0 0.0
        %1771 = vmatpush1.msra.mxu0 %v526
        %1772 = vmatprep.subr.mxu0 0.0
        %1773 = vmatpush1.msra.mxu0 %v529
        %1774 = vmatprep.subr.mxu0 0.0
        %1775 = vmatpush1.msra.mxu0 %v532
        %1776 = vmatprep.subr.mxu0 0.0
        %1777 = vmatpush1.msra.mxu0 %v535
        %1778 = vmatprep.subr.mxu0 0.0
        %1779 = vmatpush1.msra.mxu0 %v538
        %1780 = vmatprep.subr.mxu0 0.0
        %1781 = vmatpush1.msra.mxu0 %v541
        %1782 = vmatprep.subr.mxu0 0.0
        %1783 = vmatpush1.msra.mxu0 %v544
        %1784 = vmatprep.subr.mxu0 0.0
        %1785 = vmatpush1.msra.mxu0 %v547
        %1786 = vmatprep.subr.mxu0 0.0
        %1787 = vmatpush1.msra.mxu0 %v550
        %1788 = vmatprep.subr.mxu0 0.0
        %1789 = vmatpush1.msra.mxu0 %v553
        %1790 = vmatprep.subr.mxu0 0.0
        %1791 = vmatpush1.msra.mxu0 %v556
        %1792 = vmatprep.subr.mxu0 0.0
        %1793 = vmatpush1.msra.mxu0 %v559
        %1794 = vmatprep.subr.mxu0 0.0
        %1795 = vmatpush1.msra.mxu0 %v562
        %1796 = vmatprep.subr.mxu0 0.0
        %1797 = vmatpush1.msra.mxu0 %v565
        %1798 = vmatprep.subr.mxu0 0.0
        %1799 = vmatpush1.msra.mxu0 %v568
        %1800 = vmatprep.subr.mxu0 0.0
        %1801 = vmatpush1.msra.mxu0 %v571
        %1802 = vmatprep.subr.mxu0 0.0
        %1803 = vmatpush1.msra.mxu0 %v574
        %1804 = vmatprep.subr.mxu0 0.0
        %1805 = vmatpush1.msra.mxu0 %v577
        %1806 = vmatprep.subr.mxu0 0.0
        %1807 = vmatpush1.msra.mxu0 %v580
        %1808 = vmatprep.subr.mxu0 0.0
        %1809 = vmatpush1.msra.mxu0 %v583
        %1810 = vmatprep.mubr.f32.mxu0 %v191
        %1811 = vmatmul.mubr.f32.gmra.mrb[0].mxu0 %v190
        %v1812 = vpop.f32.mrb[0].mxu0
        %v1813 = vadd.f32 %v1743, %v1812
        %v1814 = vpop.f32.mrb[0].mxu0
        %1815 = vdwg.mxu0
        %1816 = vmatprep.subr.mxu0 0.0
        %1817 = vmatpush1.msra.mxu0 %v586
        %1818 = vmatprep.subr.mxu0 0.0
        %1819 = vmatpush1.msra.mxu0 %v589
        %1820 = vmatprep.subr.mxu0 0.0
        %1821 = vmatpush1.msra.mxu0 %v592
        %1822 = vmatprep.subr.mxu0 0.0
        %1823 = vmatpush1.msra.mxu0 %v595
        %1824 = vmatprep.subr.mxu0 0.0
        %1825 = vmatpush1.msra.mxu0 %v598
        %1826 = vmatprep.subr.mxu0 0.0
        %1827 = vmatpush1.msra.mxu0 %v601
        %1828 = vmatprep.subr.mxu0 0.0
        %1829 = vmatpush1.msra.mxu0 %v604
        %1830 = vmatprep.subr.mxu0 0.0
        %1831 = vmatpush1.msra.mxu0 %v607
        %1832 = vmatprep.subr.mxu0 0.0
        %1833 = vmatpush1.msra.mxu0 %v610
        %1834 = vmatprep.subr.mxu0 0.0
        %1835 = vmatpush1.msra.mxu0 %v613
        %1836 = vmatprep.subr.mxu0 0.0
        %1837 = vmatpush1.msra.mxu0 %v616
        %1838 = vmatprep.subr.mxu0 0.0
        %1839 = vmatpush1.msra.mxu0 %v619
        %1840 = vmatprep.subr.mxu0 0.0
        %1841 = vmatpush1.msra.mxu0 %v622
        %1842 = vmatprep.subr.mxu0 0.0
        %1843 = vmatpush1.msra.mxu0 %v625
        %1844 = vmatprep.subr.mxu0 0.0
        %1845 = vmatpush1.msra.mxu0 %v628
        %1846 = vmatprep.subr.mxu0 0.0
        %1847 = vmatpush1.msra.mxu0 %v631
        %1848 = vmatprep.subr.mxu0 0.0
        %1849 = vmatpush1.msra.mxu0 %v634
        %1850 = vmatprep.subr.mxu0 0.0
        %1851 = vmatpush1.msra.mxu0 %v637
        %1852 = vmatprep.subr.mxu0 0.0
        %1853 = vmatpush1.msra.mxu0 %v640
        %1854 = vmatprep.subr.mxu0 0.0
        %1855 = vmatpush1.msra.mxu0 %v643
        %1856 = vmatprep.subr.mxu0 0.0
        %1857 = vmatpush1.msra.mxu0 %v646
        %1858 = vmatprep.subr.mxu0 0.0
        %1859 = vmatpush1.msra.mxu0 %v649
        %1860 = vmatprep.subr.mxu0 0.0
        %1861 = vmatpush1.msra.mxu0 %v652
        %1862 = vmatprep.subr.mxu0 0.0
        %1863 = vmatpush1.msra.mxu0 %v655
        %1864 = vmatprep.subr.mxu0 0.0
        %1865 = vmatpush1.msra.mxu0 %v658
        %1866 = vmatprep.subr.mxu0 0.0
        %1867 = vmatpush1.msra.mxu0 %v661
        %1868 = vmatprep.subr.mxu0 0.0
        %1869 = vmatpush1.msra.mxu0 %v664
        %1870 = vmatprep.subr.mxu0 0.0
        %1871 = vmatpush1.msra.mxu0 %v667
        %1872 = vmatprep.subr.mxu0 0.0
        %1873 = vmatpush1.msra.mxu0 %v670
        %1874 = vmatprep.subr.mxu0 0.0
        %1875 = vmatpush1.msra.mxu0 %v673
        %1876 = vmatprep.subr.mxu0 0.0
        %1877 = vmatpush1.msra.mxu0 %v676
        %1878 = vmatprep.subr.mxu0 0.0
        %1879 = vmatpush1.msra.mxu0 %v679
        %1880 = vmatprep.mubr.f32.mxu0 %v193
        %1881 = vmatmul.mubr.f32.gmra.mrb[0].mxu0 %v192
        %v1882 = vpop.f32.mrb[0].mxu0
        %v1883 = vadd.f32 %v1813, %v1882
        %v1884 = vpop.f32.mrb[0].mxu0
        %1885 = vdwg.mxu0
        %1886 = vmatprep.subr.mxu0 0.0
        %1887 = vmatpush1.msra.mxu0 %v682
        %1888 = vmatprep.subr.mxu0 0.0
        %1889 = vmatpush1.msra.mxu0 %v685
        %1890 = vmatprep.subr.mxu0 0.0
        %1891 = vmatpush1.msra.mxu0 %v688
        %1892 = vmatprep.subr.mxu0 0.0
        %1893 = vmatpush1.msra.mxu0 %v691
        %1894 = vmatprep.subr.mxu0 0.0
        %1895 = vmatpush1.msra.mxu0 %v694
        %1896 = vmatprep.subr.mxu0 0.0
        %1897 = vmatpush1.msra.mxu0 %v697
        %1898 = vmatprep.subr.mxu0 0.0
        %1899 = vmatpush1.msra.mxu0 %v700
        %1900 = vmatprep.subr.mxu0 0.0
        %1901 = vmatpush1.msra.mxu0 %v703
        %1902 = vmatprep.subr.mxu0 0.0
        %1903 = vmatpush1.msra.mxu0 %v706
        %1904 = vmatprep.subr.mxu0 0.0
        %1905 = vmatpush1.msra.mxu0 %v709
        %1906 = vmatprep.subr.mxu0 0.0
        %1907 = vmatpush1.msra.mxu0 %v712
        %1908 = vmatprep.subr.mxu0 0.0
        %1909 = vmatpush1.msra.mxu0 %v715
        %1910 = vmatprep.subr.mxu0 0.0
        %1911 = vmatpush1.msra.mxu0 %v718
        %1912 = vmatprep.subr.mxu0 0.0
        %1913 = vmatpush1.msra.mxu0 %v721
        %1914 = vmatprep.subr.mxu0 0.0
        %1915 = vmatpush1.msra.mxu0 %v724
        %1916 = vmatprep.subr.mxu0 0.0
        %1917 = vmatpush1.msra.mxu0 %v727
        %1918 = vmatprep.subr.mxu0 0.0
        %1919 = vmatpush1.msra.mxu0 %v730
        %1920 = vmatprep.subr.mxu0 0.0
        %1921 = vmatpush1.msra.mxu0 %v733
        %1922 = vmatprep.subr.mxu0 0.0
        %1923 = vmatpush1.msra.mxu0 %v736
        %1924 = vmatprep.subr.mxu0 0.0
        %1925 = vmatpush1.msra.mxu0 %v739
        %1926 = vmatprep.subr.mxu0 0.0
        %1927 = vmatpush1.msra.mxu0 %v742
        %1928 = vmatprep.subr.mxu0 0.0
        %1929 = vmatpush1.msra.mxu0 %v745
        %1930 = vmatprep.subr.mxu0 0.0
        %1931 = vmatpush1.msra.mxu0 %v748
        %1932 = vmatprep.subr.mxu0 0.0
        %1933 = vmatpush1.msra.mxu0 %v751
        %1934 = vmatprep.subr.mxu0 0.0
        %1935 = vmatpush1.msra.mxu0 %v754
        %1936 = vmatprep.subr.mxu0 0.0
        %1937 = vmatpush1.msra.mxu0 %v757
        %1938 = vmatprep.subr.mxu0 0.0
        %1939 = vmatpush1.msra.mxu0 %v760
        %1940 = vmatprep.subr.mxu0 0.0
        %1941 = vmatpush1.msra.mxu0 %v763
        %1942 = vmatprep.subr.mxu0 0.0
        %1943 = vmatpush1.msra.mxu0 %v766
        %1944 = vmatprep.subr.mxu0 0.0
        %1945 = vmatpush1.msra.mxu0 %v769
        %1946 = vmatprep.subr.mxu0 0.0
        %1947 = vmatpush1.msra.mxu0 %v772
        %1948 = vmatprep.subr.mxu0 0.0
        %1949 = vmatpush1.msra.mxu0 %v775
        %1950 = vmatprep.mubr.f32.mxu0 %v195
        %1951 = vmatmul.mubr.f32.gmra.mrb[0].mxu0 %v194
        %v1952 = vpop.f32.mrb[0].mxu0
        %v1953 = vadd.f32 %v1883, %v1952
        %v1954 = vpop.f32.mrb[0].mxu0
        %1955 = vdwg.mxu0
        %1956 = vmatprep.subr.mxu0 0.0
        %1957 = vmatpush1.msra.mxu0 %v778
        %1958 = vmatprep.subr.mxu0 0.0
        %1959 = vmatpush1.msra.mxu0 %v781
        %1960 = vmatprep.subr.mxu0 0.0
        %1961 = vmatpush1.msra.mxu0 %v784
        %1962 = vmatprep.subr.mxu0 0.0
        %1963 = vmatpush1.msra.mxu0 %v787
        %1964 = vmatprep.subr.mxu0 0.0
        %1965 = vmatpush1.msra.mxu0 %v790
        %1966 = vmatprep.subr.mxu0 0.0
        %1967 = vmatpush1.msra.mxu0 %v793
        %1968 = vmatprep.subr.mxu0 0.0
        %1969 = vmatpush1.msra.mxu0 %v796
        %1970 = vmatprep.subr.mxu0 0.0
        %1971 = vmatpush1.msra.mxu0 %v799
        %1972 = vmatprep.subr.mxu0 0.0
        %1973 = vmatpush1.msra.mxu0 %v802
        %1974 = vmatprep.subr.mxu0 0.0
        %1975 = vmatpush1.msra.mxu0 %v805
        %1976 = vmatprep.subr.mxu0 0.0
        %1977 = vmatpush1.msra.mxu0 %v808
        %1978 = vmatprep.subr.mxu0 0.0
        %1979 = vmatpush1.msra.mxu0 %v811
        %1980 = vmatprep.subr.mxu0 0.0
        %1981 = vmatpush1.msra.mxu0 %v814
        %1982 = vmatprep.subr.mxu0 0.0
        %1983 = vmatpush1.msra.mxu0 %v817
        %1984 = vmatprep.subr.mxu0 0.0
        %1985 = vmatpush1.msra.mxu0 %v820
        %1986 = vmatprep.subr.mxu0 0.0
        %1987 = vmatpush1.msra.mxu0 %v823
        %1988 = vmatprep.subr.mxu0 0.0
        %1989 = vmatpush1.msra.mxu0 %v826
        %1990 = vmatprep.subr.mxu0 0.0
        %1991 = vmatpush1.msra.mxu0 %v829
        %1992 = vmatprep.subr.mxu0 0.0
        %1993 = vmatpush1.msra.mxu0 %v832
        %1994 = vmatprep.subr.mxu0 0.0
        %1995 = vmatpush1.msra.mxu0 %v835
        %1996 = vmatprep.subr.mxu0 0.0
        %1997 = vmatpush1.msra.mxu0 %v838
        %1998 = vmatprep.subr.mxu0 0.0
        %1999 = vmatpush1.msra.mxu0 %v841
        %2000 = vmatprep.subr.mxu0 0.0
        %2001 = vmatpush1.msra.mxu0 %v844
        %2002 = vmatprep.subr.mxu0 0.0
        %2003 = vmatpush1.msra.mxu0 %v847
        %2004 = vmatprep.subr.mxu0 0.0
        %2005 = vmatpush1.msra.mxu0 %v850
        %2006 = vmatprep.subr.mxu0 0.0
        %2007 = vmatpush1.msra.mxu0 %v853
        %2008 = vmatprep.subr.mxu0 0.0
        %2009 = vmatpush1.msra.mxu0 %v856
        %2010 = vmatprep.subr.mxu0 0.0
        %2011 = vmatpush1.msra.mxu0 %v859
        %2012 = vmatprep.subr.mxu0 0.0
        %2013 = vmatpush1.msra.mxu0 %v862
        %2014 = vmatprep.subr.mxu0 0.0
        %2015 = vmatpush1.msra.mxu0 %v865
        %2016 = vmatprep.subr.mxu0 0.0
        %2017 = vmatpush1.msra.mxu0 %v868
        %2018 = vmatprep.subr.mxu0 0.0
        %2019 = vmatpush1.msra.mxu0 %v871
        %2020 = vmatprep.mubr.f32.mxu0 %v197
        %2021 = vmatmul.mubr.f32.gmra.mrb[0].mxu0 %v196
        %v2022 = vpop.f32.mrb[0].mxu0
        %v2023 = vadd.f32 %v1953, %v2022
        %v2024 = vpop.f32.mrb[0].mxu0
        %2025 = vdwg.mxu0
        %2026 = vmatprep.subr.mxu0 0.0
        %2027 = vmatpush1.msra.mxu0 %v874
        %2028 = vmatprep.subr.mxu0 0.0
        %2029 = vmatpush1.msra.mxu0 %v877
        %2030 = vmatprep.subr.mxu0 0.0
        %2031 = vmatpush1.msra.mxu0 %v880
        %2032 = vmatprep.subr.mxu0 0.0
        %2033 = vmatpush1.msra.mxu0 %v883
        %2034 = vmatprep.subr.mxu0 0.0
        %2035 = vmatpush1.msra.mxu0 %v886
        %2036 = vmatprep.subr.mxu0 0.0
        %2037 = vmatpush1.msra.mxu0 %v889
        %2038 = vmatprep.subr.mxu0 0.0
        %2039 = vmatpush1.msra.mxu0 %v892
        %2040 = vmatprep.subr.mxu0 0.0
        %2041 = vmatpush1.msra.mxu0 %v895
        %2042 = vmatprep.subr.mxu0 0.0
        %2043 = vmatpush1.msra.mxu0 %v898
        %2044 = vmatprep.subr.mxu0 0.0
        %2045 = vmatpush1.msra.mxu0 %v901
        %2046 = vmatprep.subr.mxu0 0.0
        %2047 = vmatpush1.msra.mxu0 %v904
        %2048 = vmatprep.subr.mxu0 0.0
        %2049 = vmatpush1.msra.mxu0 %v907
        %2050 = vmatprep.subr.mxu0 0.0
        %2051 = vmatpush1.msra.mxu0 %v910
        %2052 = vmatprep.subr.mxu0 0.0
        %2053 = vmatpush1.msra.mxu0 %v913
        %2054 = vmatprep.subr.mxu0 0.0
        %2055 = vmatpush1.msra.mxu0 %v916
        %2056 = vmatprep.subr.mxu0 0.0
        %2057 = vmatpush1.msra.mxu0 %v919
        %2058 = vmatprep.subr.mxu0 0.0
        %2059 = vmatpush1.msra.mxu0 %v922
        %2060 = vmatprep.subr.mxu0 0.0
        %2061 = vmatpush1.msra.mxu0 %v925
        %2062 = vmatprep.subr.mxu0 0.0
        %2063 = vmatpush1.msra.mxu0 %v928
        %2064 = vmatprep.subr.mxu0 0.0
        %2065 = vmatpush1.msra.mxu0 %v931
        %2066 = vmatprep.subr.mxu0 0.0
        %2067 = vmatpush1.msra.mxu0 %v934
        %2068 = vmatprep.subr.mxu0 0.0
        %2069 = vmatpush1.msra.mxu0 %v937
        %2070 = vmatprep.subr.mxu0 0.0
        %2071 = vmatpush1.msra.mxu0 %v940
        %2072 = vmatprep.subr.mxu0 0.0
        %2073 = vmatpush1.msra.mxu0 %v943
        %2074 = vmatprep.subr.mxu0 0.0
        %2075 = vmatpush1.msra.mxu0 %v946
        %2076 = vmatprep.subr.mxu0 0.0
        %2077 = vmatpush1.msra.mxu0 %v949
        %2078 = vmatprep.subr.mxu0 0.0
        %2079 = vmatpush1.msra.mxu0 %v952
        %2080 = vmatprep.subr.mxu0 0.0
        %2081 = vmatpush1.msra.mxu0 %v955
        %2082 = vmatprep.subr.mxu0 0.0
        %2083 = vmatpush1.msra.mxu0 %v958
        %2084 = vmatprep.subr.mxu0 0.0
        %2085 = vmatpush1.msra.mxu0 %v961
        %2086 = vmatprep.subr.mxu0 0.0
        %2087 = vmatpush1.msra.mxu0 %v964
        %2088 = vmatprep.subr.mxu0 0.0
        %2089 = vmatpush1.msra.mxu0 %v967
        %2090 = vmatprep.mubr.f32.mxu0 %v199
        %2091 = vmatmul.mubr.f32.gmra.mrb[0].mxu0 %v198
        %v2092 = vpop.f32.mrb[0].mxu0
        %v2093 = vadd.f32 %v2023, %v2092
        %v2094 = vpop.f32.mrb[0].mxu0
        %2095 = vdwg.mxu0
        %p2096 = scmp.eq.s32.totalorder %s15, 0
        // Predicated region
        $region33: #{tpu_custom_call.1} parent=31 // pred_check
          %p2097 = pneg %p2096
        $region34: #{tpu_custom_call.1} parent=31 // pred_check_branch
          %2099 = sbr.rel (%p2097) target = $region36
        $region35: #{tpu_custom_call.1} parent=31 // pred_region
          %v2100 = vld [vmem:[%s2] sm:$0x7]
          %v2102 = vlaneseq
          %v2103 = vshrl.u32 %v2102, 7
          %v2104 = vsub.s32 0, %v2103
          %v2105 = vrot.slane %v2100, %v2104
          %v2106 = vlaneseq
          %v2107 = vshrl.u32 %v2106, 7
          %v2108 = vsub.s32 1, %v2107
          %v2109 = vrot.slane %v2100, %v2108
          %v2110 = vlaneseq
          %v2111 = vshrl.u32 %v2110, 7
          %v2112 = vsub.s32 2, %v2111
          %v2113 = vrot.slane %v2100, %v2112
          %v2117 = vadd.f32 %v1532, %v2105
          %v2118 = vadd.f32 %v1534, %v2109
          %v2119 = vadd.f32 %v2093, %v2113
          %2120 = vst [vmem:[#allocation2] sm:$0xff] %v2117
          %2121 = vst [vmem:[#allocation2 + $0x8] sm:$0xff] %v2118
          %vm2122 = vcmask 359424
          %2123 = vst.msk [vmem:[#allocation2 + $0x10] sm:$0xff] %vm2122, %v2119
        $region36: #{tpu_custom_call.1} parent=31 // pred_fallthru
          _
        %p2124 = scmp.ne.s32.totalorder %s15, 0
        // Predicated region
        $region37: #{tpu_custom_call.1} parent=31 // pred_check
          %p2125 = pneg %p2124
        $region38: #{tpu_custom_call.1} parent=31 // pred_check_branch
          %2127 = sbr.rel (%p2125) target = $region40
        $region39: #{tpu_custom_call.1} parent=31 // pred_region
          %v2128 = vld [vmem:[#allocation2] sm:$0xff]
          %v2129 = vld [vmem:[#allocation2 + $0x8] sm:$0xff]
          %v2130 = vld [vmem:[#allocation2 + $0x10] sm:$0xff]
          %v2131 = vadd.f32 %v2128, %v1532
          %v2132 = vadd.f32 %v2129, %v1534
          %v2133 = vadd.f32 %v2130, %v2093
          %2134 = vst [vmem:[#allocation2] sm:$0xff] %v2131
          %2135 = vst [vmem:[#allocation2 + $0x8] sm:$0xff] %v2132
          %vm2136 = vcmask 359424
          %2137 = vst.msk [vmem:[#allocation2 + $0x10] sm:$0xff] %vm2136, %v2133
        $region40: #{tpu_custom_call.1} parent=31 // pred_fallthru
          _
        // Predicated region
        $region41: #{tpu_custom_call.1} parent=31 // pred_check
          %p2138 = pneg %p101
        $region42: #{tpu_custom_call.1} parent=31 // pred_check_branch
          %2140 = sbr.rel (%p2138) target = $region44
        $region43: #{tpu_custom_call.1} parent=31 // pred_region
          %s2142 = ssub.s32 384, 384
          %2143 = vsyncadd [#allocation3], %s2142
          %s2145 = sshll.u32 [#allocation2], 4
          %s2146 = int_to_ptr.vmem [resolvable:$true] %s2145
          %2148 = dma.vmem_to_hbm [thread:$0]  %s2146, 384, %s3, [#allocation3]
        $region44: #{tpu_custom_call.1} parent=31 // pred_fallthru
          _
        // Predicated region
        $region45: #{tpu_custom_call.1} parent=31 // pred_check
          %p2149 = pneg %p101
        $region46: #{tpu_custom_call.1} parent=31 // pred_check_branch
          %2151 = sbr.rel (%p2149) target = $region48
        $region47: #{tpu_custom_call.1} parent=31 // pred_region
          %2152 = dma.done [#allocation3], 384
        $region48: #{tpu_custom_call.1} parent=31 // pred_fallthru
          _
      $region32: #{tpu_custom_call.1} parent=5 // pred_fallthru
        _
      %p2153 = scmp.le.s32.totalorder 2, %s10
      // Predicated region
      $region49: #{tpu_custom_call.1} parent=5 // pred_check
        %p2154 = pneg %p2153
      $region50: #{tpu_custom_call.1} parent=5 // pred_check_branch
        %2156 = sbr.rel (%p2154) target = $region52
      $region51: #{tpu_custom_call.1} parent=5 // pred_region
        %s2157 = ssub.s32 %s10, 2
      $region52: #{tpu_custom_call.1} parent=5 // pred_fallthru
        _
    $region6: #{tpu_custom_call.1} parent=1 // loop_footer
      %s14 = sadd.s32 1, %s10
    $region7: #{tpu_custom_call.1} parent=1 // loop_footer_branch
      %9 = sbr.rel target = $region3
    $region8: #{tpu_custom_call.1} parent=1 // loop_exit
      _
    %2158 = vsyncpa [#allocation3], 1
    %s2159 = scalar_lea.sflag [#allocation3], 1
    %2160 = vsyncpa %s2159, 1

</llo_original>
